<compile_context>
chip_gen: v7x
topology: tpu7x:2x2x1
jax: 0.10.0
libtpu: 0.0.40
codegen_flags: <defaults>
</compile_context>

<pallas_src>
import functools

import jax
import jax.numpy as jnp
from jax.experimental import pallas as pl
from jax.experimental.pallas import tpu as pltpu

LANE = 128          # lane width (last dim)
SUBLANE = 8         # sublane width (second-to-last dim)
MAX_TM = 256        # dst-node rows of A per tile
MAX_TK = 512        # src-node columns of A per reduction step
LN_EPS = 1e-5       # torch.nn.LayerNorm default
VMEM_LIMIT = 32 * 1024 * 1024   # safe on v5e/v6e (128 MiB) and v7x (64 MiB)


def _round_up(x, m):
    return (x + m - 1) // m * m


# -----------------------------------------------------------------------------
# Pallas kernels
# -----------------------------------------------------------------------------
def film_layer_kernel(feat_ref, wcat_ref, lnw_ref, lnb_ref, a_ref,
                      out_ref, acc_ref, *, out_pad, inv_out):
    """One (dst-tile i, src-tile k) step of a GNNFiLMLayer."""
    k = pl.program_id(1)

    @pl.when(k == 0)
    def _():
        acc_ref[...] = jnp.zeros_like(acc_ref)

    # Fused W / gamma / beta projection: single MXU matmul, shared LHS.
    z = jnp.dot(feat_ref[...], wcat_ref[...],
                preferred_element_type=jnp.float32)          # [tk, 3*out_pad] f32
    msg = z[:, :out_pad]
    gamma = z[:, out_pad:2 * out_pad]
    beta = z[:, 2 * out_pad:]
    msg = jnp.maximum(gamma * msg + beta, 0.0)                # FiLM + relu_ (f32 VPU)

    # Graph aggregation (copy_u + sum) for this source tile.
    acc_ref[...] += jnp.dot(a_ref[...], msg.astype(jnp.bfloat16),
                            preferred_element_type=jnp.float32)

    @pl.when(k == pl.num_programs(1) - 1)
    def _():
        h = acc_ref[...]
        # One-pass LayerNorm stats; pad columns of h are exact zeros, so
        # dividing by the real out_size (inv_out) gives exact statistics.
        mean = jnp.sum(h, axis=-1, keepdims=True) * inv_out
        ex2 = jnp.sum(h * h, axis=-1, keepdims=True) * inv_out
        var = ex2 - mean * mean
        hn = (h - mean) * jax.lax.rsqrt(var + LN_EPS)
        out_ref[...] = (hn * lnw_ref[...] + lnb_ref[...]).astype(out_ref.dtype)


def predict_kernel(feat_ref, wT_ref, b_ref, out_ref):
    """out = sigmoid(feat @ Wp^T + bp) for one row tile."""
    logits = jnp.dot(feat_ref[...], wT_ref[...],
                     preferred_element_type=jnp.float32) + b_ref[...]
    out_ref[...] = jax.nn.sigmoid(logits).astype(out_ref.dtype)


# -----------------------------------------------------------------------------
# Wrappers (padding + tiled pallas_call)
# -----------------------------------------------------------------------------
def film_layer(feat, wcat, lnw, lnb, adj, out_size):
    """feat: [>=n_src, <=in_pad] f32; wcat: [in_pad, 3*out_pad] bf16;
       lnw/lnb: [1, out_pad] f32 (zero-padded); adj: [n_dst, n_src] 0/1.
       Returns [n_dst_pad, out_pad] f32 (pad feature columns exactly 0)."""
    in_pad = wcat.shape[0]
    out_pad = wcat.shape[1] // 3
    n_dst, n_src = adj.shape

    tm = min(MAX_TM, _round_up(n_dst, SUBLANE))
    tk = min(MAX_TK, _round_up(n_src, LANE))
    n_dst_pad = _round_up(n_dst, tm)
    n_src_pad = _round_up(n_src, tk)

    # Pad + downcast MXU operands to bf16 (adjacency is 0/1 -> exact).
    r = min(feat.shape[0], n_src)
    c = min(feat.shape[1], in_pad)
    feat_p = jnp.zeros((n_src_pad, in_pad), jnp.bfloat16)
    feat_p = feat_p.at[:r, :c].set(feat[:r, :c].astype(jnp.bfloat16))
    adj_p = jnp.zeros((n_dst_pad, n_src_pad), jnp.bfloat16)
    adj_p = adj_p.at[:n_dst, :n_src].set(adj.astype(jnp.bfloat16))

    grid = (n_dst_pad // tm, n_src_pad // tk)
    kern = functools.partial(film_layer_kernel, out_pad=out_pad,
                             inv_out=1.0 / float(out_size))

    return pl.pallas_call(
        kern,
        out_shape=jax.ShapeDtypeStruct((n_dst_pad, out_pad), jnp.float32),
        grid_spec=pltpu.PrefetchScalarGridSpec(
            num_scalar_prefetch=0,
            grid=grid,
            in_specs=[
                pl.BlockSpec((tk, in_pad), lambda i, k: (k, 0)),           # feat tile
                pl.BlockSpec((in_pad, 3 * out_pad), lambda i, k: (0, 0)),  # fused weights
                pl.BlockSpec((1, out_pad), lambda i, k: (0, 0)),           # ln_w
                pl.BlockSpec((1, out_pad), lambda i, k: (0, 0)),           # ln_b
                pl.BlockSpec((tm, tk), lambda i, k: (i, k)),               # A tile
            ],
            out_specs=pl.BlockSpec((tm, out_pad), lambda i, k: (i, 0)),
            scratch_shapes=[pltpu.VMEM((tm, out_pad), jnp.float32)],
        ),
        compiler_params=pltpu.CompilerParams(
            dimension_semantics=("parallel", "arbitrary"),
            vmem_limit_bytes=VMEM_LIMIT,
        ),
    )(feat_p, wcat, lnw, lnb, adj_p)


def predict(feat, wpT, bp, n_rows):
    """feat: [>=n_rows, <=hidden_pad] f32; wpT: [hidden_pad, out_pad] bf16;
       bp: [1, out_pad] f32.  Returns [n_pad, out_pad] f32."""
    hidden_pad, out_pad = wpT.shape
    tm = min(MAX_TM, _round_up(n_rows, SUBLANE))
    n_pad = _round_up(n_rows, tm)

    r = min(feat.shape[0], n_pad)
    c = min(feat.shape[1], hidden_pad)
    feat_p = jnp.zeros((n_pad, hidden_pad), jnp.bfloat16)
    feat_p = feat_p.at[:r, :c].set(feat[:r, :c].astype(jnp.bfloat16))

    return pl.pallas_call(
        predict_kernel,
        out_shape=jax.ShapeDtypeStruct((n_pad, out_pad), jnp.float32),
        grid_spec=pltpu.PrefetchScalarGridSpec(
            num_scalar_prefetch=0,
            grid=(n_pad // tm,),
            in_specs=[
                pl.BlockSpec((tm, hidden_pad), lambda i: (i, 0)),
                pl.BlockSpec((hidden_pad, out_pad), lambda i: (0, 0)),
                pl.BlockSpec((1, out_pad), lambda i: (0, 0)),
            ],
            out_specs=pl.BlockSpec((tm, out_pad), lambda i: (i, 0)),
        ),
        compiler_params=pltpu.CompilerParams(
            dimension_semantics=("parallel",),
            vmem_limit_bytes=VMEM_LIMIT,
        ),
    )(feat_p, wpT, bp)


# -----------------------------------------------------------------------------
# Parameter packing (done ONCE, not per forward call)
# -----------------------------------------------------------------------------
def pack_params(params):
    """Pre-pack weights into the kernel layout: transposed, gamma/beta/W
       concatenated along the output axis, zero-padded to lane multiples,
       MXU operands downcast to bf16."""
    packed = {"film_layers": []}
    out_sizes = []
    for layer_p in params["film_layers"]:
        w = layer_p["W"]            # [out, in]
        film = layer_p["film"]      # [2*out, in]
        out_size, in_size = w.shape
        in_pad = _round_up(in_size, LANE)
        out_pad = _round_up(out_size, LANE)

        wcat = jnp.zeros((in_pad, 3 * out_pad), jnp.float32)
        wcat = wcat.at[:in_size, 0:out_size].set(w.T)                               # msg
        wcat = wcat.at[:in_size, out_pad:out_pad + out_size].set(film[:out_size].T)  # gamma
        wcat = wcat.at[:in_size, 2 * out_pad:2 * out_pad + out_size].set(
            film[out_size:].T)                                                       # beta

        lnw = jnp.zeros((1, out_pad), jnp.float32).at[0, :out_size].set(layer_p["ln_w"])
        lnb = jnp.zeros((1, out_pad), jnp.float32).at[0, :out_size].set(layer_p["ln_b"])

        packed["film_layers"].append({
            "wcat": wcat.astype(jnp.bfloat16),
            "ln_w": lnw,
            "ln_b": lnb,
        })
        out_sizes.append(out_size)

    wp = params["predict_w"]        # [out, hidden]
    bp = params["predict_b"]        # [out]
    p_out, hidden = wp.shape
    hidden_pad = _round_up(hidden, LANE)
    p_out_pad = _round_up(p_out, LANE)
    wpT = jnp.zeros((hidden_pad, p_out_pad), jnp.float32).at[:hidden, :p_out].set(wp.T)
    bpp = jnp.zeros((1, p_out_pad), jnp.float32).at[0, :p_out].set(bp)
    packed["predict_wT"] = wpT.astype(jnp.bfloat16)
    packed["predict_b"] = bpp
    return packed, tuple(out_sizes), p_out


# -----------------------------------------------------------------------------
# GNNFiLM forward
# -----------------------------------------------------------------------------
@functools.partial(jax.jit, static_argnums=(1, 2))
def _forward_compute(packed, out_sizes, predict_out_size, features, adjs):
    h = features
    for i, layer_p in enumerate(packed["film_layers"]):
        h = film_layer(h, layer_p["wcat"], layer_p["ln_w"], layer_p["ln_b"],
                       adjs[i], out_sizes[i])
    n_final = adjs[-1].shape[0]
    h = predict(h, packed["predict_wT"], packed["predict_b"], n_final)
    return h[:n_final, :predict_out_size]


def gnn_film_forward(packed, out_sizes, predict_out_size, features, adjs):
    h = _forward_compute(packed, out_sizes, predict_out_size, features, adjs)

    # size bookkeeping (mirrors the torch.no_grad() block; pure Python on
    # static shapes -- h after layer i has numel n_dst_i * out_size_i)
    actv_size_after_each_block = [adjs[i].shape[0] * out_sizes[i]
                                  for i in range(len(out_sizes))]
    total_comb_size = 0
    total_actv_size = 0
    old_comb_size = 0
    old_actv_size = 0
    for blkid in range(len(out_sizes)):
        cur_block_comb_size = adjs[blkid].shape[0] * out_sizes[blkid]
        total_comb_size += old_comb_size
        old_comb_size += cur_block_comb_size
        total_actv_size += old_actv_size
        old_actv_size += actv_size_after_each_block[blkid]

    return h, total_comb_size, total_actv_size


# -----------------------------------------------------------------------------
# Deterministic parameter / input construction
# -----------------------------------------------------------------------------
def init_params(key, in_size, hidden_size, out_size, num_layers):
    params = {"film_layers": []}
    sizes = [(in_size, hidden_size)] + [(hidden_size, hidden_size)] * (num_layers - 1)
    for (ins, outs) in sizes:
        key, k1, k2 = jax.random.split(key, 3)
        params["film_layers"].append({
            "W":    jax.random.normal(k1, (outs, ins), jnp.float32) * 0.1,
            "film": jax.random.normal(k2, (2 * outs, ins), jnp.float32) * 0.1,
            "ln_w": jnp.ones((outs,), jnp.float32),
            "ln_b": jnp.zeros((outs,), jnp.float32),
        })
    key, kp, kb = jax.random.split(key, 3)
    params["predict_w"] = jax.random.normal(kp, (out_size, hidden_size), jnp.float32) * 0.1
    params["predict_b"] = jax.random.normal(kb, (out_size,), jnp.float32) * 0.1
    return params


if __name__ == "__main__":
    key = jax.random.PRNGKey(0)

    in_size, hidden_size, out_size, num_layers = 8, 16, 4, 2
    # synthetic NodeFlow: node counts per layer (num_layers blocks -> L+1 layers)
    layer_nodes = [16, 8, 8]

    key, kf = jax.random.split(key)
    features = jax.random.normal(kf, (layer_nodes[0], in_size), jnp.float32)

    adjs = []
    for i in range(num_layers):
        key, ka = jax.random.split(key)
        adjs.append(
            jax.random.bernoulli(
                ka, 0.4, (layer_nodes[i + 1], layer_nodes[i])
            ).astype(jnp.float32)
        )

    key, kp = jax.random.split(key)
    params = init_params(kp, in_size, hidden_size, out_size, num_layers)
    packed, out_sizes, predict_out_size = pack_params(params)

    h, total_comb, total_actv = gnn_film_forward(
        packed, out_sizes, predict_out_size, features, adjs)
    h = jax.block_until_ready(h)

    assert h.shape == (layer_nodes[-1], out_size)
    assert jnp.all(jnp.isfinite(h))
    assert jnp.all((h >= 0.0) & (h <= 1.0))   # sigmoid output range
    print("KERNEL_OK")
</pallas_src>

<mosaic_0001>
module attributes {stable_mosaic.version = 11 : i64} {
  func.func @film_layer_kernel(%arg0: i32, %arg1: i32, %arg2: memref<128x128xbf16, #tpu.memory_space<vmem>>, %arg3: memref<128x384xbf16, #tpu.memory_space<vmem>>, %arg4: memref<1x128xf32, #tpu.memory_space<vmem>>, %arg5: memref<1x128xf32, #tpu.memory_space<vmem>>, %arg6: memref<8x128xbf16, #tpu.memory_space<vmem>>, %arg7: memref<8x128xf32, #tpu.memory_space<vmem>>, %arg8: memref<8x128xf32, #tpu.memory_space<vmem>>) attributes {dimension_semantics = [#tpu.dimension_semantics<parallel>, #tpu.dimension_semantics<arbitrary>], iteration_bounds = array<i64: 1, 1>, scalar_prefetch = 0 : i64, scratch_operands = 1 : i64, tpu.core_type = #tpu.core_type<tc>, window_params = [{transform_indices = @transform_0, window_bounds = array<i64: 128, 128>}, {pipeline_mode = #tpu.pipeline_mode<synchronous>, transform_indices = @transform_1, window_bounds = array<i64: 128, 384>}, {pipeline_mode = #tpu.pipeline_mode<synchronous>, transform_indices = @transform_2, window_bounds = array<i64: 1, 128>}, {pipeline_mode = #tpu.pipeline_mode<synchronous>, transform_indices = @transform_3, window_bounds = array<i64: 1, 128>}, {transform_indices = @transform_4, window_bounds = array<i64: 8, 128>}, {transform_indices = @transform_5, window_bounds = array<i64: 8, 128>}]} {
    %c0_i32 = arith.constant 0 : i32
    %0 = arith.cmpi eq, %arg1, %c0_i32 : i32
    %1 = arith.extui %0 : i1 to i32
    %c0_i32_0 = arith.constant 0 : i32
    %2 = arith.cmpi ne, %1, %c0_i32_0 : i32
    scf.if %2 {
      %cst_14 = arith.constant 0.000000e+00 : f32
      %22 = vector.broadcast %cst_14 : f32 to vector<8x128xf32>
      %c0_15 = arith.constant 0 : index
      %c0_16 = arith.constant 0 : index
      %23 = vector.load %arg8[%c0_15, %c0_16] : memref<8x128xf32, #tpu.memory_space<vmem>>, vector<8x128xf32>
      tpu.vector_store %arg8[%c0_15, %c0_16], %22 {strides = array<i32>} : memref<8x128xf32, #tpu.memory_space<vmem>>, vector<8x128xf32>,
    } else {
    }
    %c0 = arith.constant 0 : index
    %c0_1 = arith.constant 0 : index
    %3 = vector.load %arg2[%c0, %c0_1] : memref<128x128xbf16, #tpu.memory_space<vmem>>, vector<128x128xbf16>
    %c0_2 = arith.constant 0 : index
    %c0_3 = arith.constant 0 : index
    %4 = vector.load %arg3[%c0_2, %c0_3] : memref<128x384xbf16, #tpu.memory_space<vmem>>, vector<128x384xbf16>
    %cst = arith.constant dense<0.000000e+00> : vector<128x384xf32>
    %5 = tpu.matmul %3, %4, %cst {dimension_numbers = #tpu.dot_dimension_numbers<[1], [0], [0], [1], [0, 0, 1, 1], [], []>} : vector<128x128xbf16>, vector<128x384xbf16>, vector<128x384xf32> -> vector<128x384xf32>
    %6 = vector.extract_strided_slice %5 {offsets = [0, 0], sizes = [128, 128], strides = [1, 1]} : vector<128x384xf32> to vector<128x128xf32>
    %7 = vector.extract_strided_slice %5 {offsets = [0, 128], sizes = [128, 128], strides = [1, 1]} : vector<128x384xf32> to vector<128x128xf32>
    %8 = vector.extract_strided_slice %5 {offsets = [0, 256], sizes = [128, 128], strides = [1, 1]} : vector<128x384xf32> to vector<128x128xf32>
    %9 = arith.mulf %7, %6 : vector<128x128xf32>
    %10 = arith.addf %9, %8 : vector<128x128xf32>
    %cst_4 = arith.constant 0.000000e+00 : f32
    %11 = vector.broadcast %cst_4 : f32 to vector<128x128xf32>
    %12 = arith.maximumf %10, %11 : vector<128x128xf32>
    %c0_5 = arith.constant 0 : index
    %c0_6 = arith.constant 0 : index
    %13 = vector.load %arg8[%c0_5, %c0_6] : memref<8x128xf32, #tpu.memory_space<vmem>>, vector<8x128xf32>
    %c0_7 = arith.constant 0 : index
    %c0_8 = arith.constant 0 : index
    %14 = vector.load %arg6[%c0_7, %c0_8] : memref<8x128xbf16, #tpu.memory_space<vmem>>, vector<8x128xbf16>
    %15 = arith.truncf %12 : vector<128x128xf32> to vector<128x128xbf16>
    %cst_9 = arith.constant dense<0.000000e+00> : vector<8x128xf32>
    %16 = tpu.matmul %14, %15, %cst_9 {dimension_numbers = #tpu.dot_dimension_numbers<[1], [0], [0], [1], [0, 0, 1, 1], [], []>} : vector<8x128xbf16>, vector<128x128xbf16>, vector<8x128xf32> -> vector<8x128xf32>
    %17 = arith.addf %13, %16 : vector<8x128xf32>
    %c0_10 = arith.constant 0 : index
    %c0_11 = arith.constant 0 : index
    %18 = vector.load %arg8[%c0_10, %c0_11] : memref<8x128xf32, #tpu.memory_space<vmem>>, vector<8x128xf32>
    tpu.vector_store %arg8[%c0_10, %c0_11], %17 {strides = array<i32>} : memref<8x128xf32, #tpu.memory_space<vmem>>, vector<8x128xf32>,
    %c0_i32_12 = arith.constant 0 : i32
    %19 = arith.cmpi eq, %arg1, %c0_i32_12 : i32
    %20 = arith.extui %19 : i1 to i32
    %c0_i32_13 = arith.constant 0 : i32
    %21 = arith.cmpi ne, %20, %c0_i32_13 : i32
    scf.if %21 {
      %c0_14 = arith.constant 0 : index
      %c0_15 = arith.constant 0 : index
      %22 = vector.load %arg8[%c0_14, %c0_15] : memref<8x128xf32, #tpu.memory_space<vmem>>, vector<8x128xf32>
      %cst_16 = arith.constant dense<0.000000e+00> : vector<8xf32>
      %23 = vector.multi_reduction <add>, %22, %cst_16 [1] : vector<8x128xf32> to vector<8xf32>
      %24 = vector.shape_cast %23 : vector<8xf32> to vector<8x1xf32>
      %cst_17 = arith.constant 6.250000e-02 : f32
      %25 = vector.broadcast %cst_17 : f32 to vector<8x1xf32>
      %26 = arith.mulf %24, %25 : vector<8x1xf32>
      %27 = arith.mulf %22, %22 : vector<8x128xf32>
      %cst_18 = arith.constant dense<0.000000e+00> : vector<8xf32>
      %28 = vector.multi_reduction <add>, %27, %cst_18 [1] : vector<8x128xf32> to vector<8xf32>
      %29 = vector.shape_cast %28 : vector<8xf32> to vector<8x1xf32>
      %cst_19 = arith.constant 6.250000e-02 : f32
      %30 = vector.broadcast %cst_19 : f32 to vector<8x1xf32>
      %31 = arith.mulf %29, %30 : vector<8x1xf32>
      %32 = arith.mulf %26, %26 : vector<8x1xf32>
      %33 = arith.subf %31, %32 : vector<8x1xf32>
      %34 = vector.broadcast %26 : vector<8x1xf32> to vector<8x128xf32>
      %35 = arith.subf %22, %34 : vector<8x128xf32>
      %cst_20 = arith.constant 9.99999974E-6 : f32
      %36 = vector.broadcast %cst_20 : f32 to vector<8x1xf32>
      %37 = arith.addf %33, %36 : vector<8x1xf32>
      %38 = math.rsqrt %37 : vector<8x1xf32>
      %39 = vector.broadcast %38 : vector<8x1xf32> to vector<8x128xf32>
      %40 = arith.mulf %35, %39 : vector<8x128xf32>
      %c0_21 = arith.constant 0 : index
      %c0_22 = arith.constant 0 : index
      %41 = vector.load %arg4[%c0_21, %c0_22] : memref<1x128xf32, #tpu.memory_space<vmem>>, vector<1x128xf32>
      %42 = vector.broadcast %41 : vector<1x128xf32> to vector<8x128xf32>
      %43 = arith.mulf %40, %42 : vector<8x128xf32>
      %c0_23 = arith.constant 0 : index
      %c0_24 = arith.constant 0 : index
      %44 = vector.load %arg5[%c0_23, %c0_24] : memref<1x128xf32, #tpu.memory_space<vmem>>, vector<1x128xf32>
      %45 = vector.broadcast %44 : vector<1x128xf32> to vector<8x128xf32>
      %46 = arith.addf %43, %45 : vector<8x128xf32>
      %c0_25 = arith.constant 0 : index
      %c0_26 = arith.constant 0 : index
      %47 = vector.load %arg7[%c0_25, %c0_26] : memref<8x128xf32, #tpu.memory_space<vmem>>, vector<8x128xf32>
      tpu.vector_store %arg7[%c0_25, %c0_26], %46 {strides = array<i32>} : memref<8x128xf32, #tpu.memory_space<vmem>>, vector<8x128xf32>,
    } else {
    }
    return
  }
  func.func @transform_0(%arg0: i32, %arg1: i32) -> (i32, i32) {
    %c0_i32 = arith.constant 0 : i32
    %c0_i32_0 = arith.constant 0 : i32
    return %arg1, %c0_i32 : i32, i32
  }
  func.func @transform_1(%arg0: i32, %arg1: i32) -> (i32, i32) {
    %c0_i32 = arith.constant 0 : i32
    %c0_i32_0 = arith.constant 0 : i32
    %c0_i32_1 = arith.constant 0 : i32
    return %c0_i32, %c0_i32_0 : i32, i32
  }
  func.func @transform_2(%arg0: i32, %arg1: i32) -> (i32, i32) {
    %c0_i32 = arith.constant 0 : i32
    %c0_i32_0 = arith.constant 0 : i32
    %c0_i32_1 = arith.constant 0 : i32
    return %c0_i32, %c0_i32_0 : i32, i32
  }
  func.func @transform_3(%arg0: i32, %arg1: i32) -> (i32, i32) {
    %c0_i32 = arith.constant 0 : i32
    %c0_i32_0 = arith.constant 0 : i32
    %c0_i32_1 = arith.constant 0 : i32
    return %c0_i32, %c0_i32_0 : i32, i32
  }
  func.func @transform_4(%arg0: i32, %arg1: i32) -> (i32, i32) {
    %c0_i32 = arith.constant 0 : i32
    return %arg0, %arg1 : i32, i32
  }
  func.func @transform_5(%arg0: i32, %arg1: i32) -> (i32, i32) {
    %c0_i32 = arith.constant 0 : i32
    %c0_i32_0 = arith.constant 0 : i32
    return %arg0, %c0_i32 : i32, i32
  }
}

module attributes {stable_mosaic.version = 11 : i64} {
  func.func @predict_kernel(%arg0: i32, %arg1: memref<8x128xbf16, #tpu.memory_space<vmem>>, %arg2: memref<128x128xbf16, #tpu.memory_space<vmem>>, %arg3: memref<1x128xf32, #tpu.memory_space<vmem>>, %arg4: memref<8x128xf32, #tpu.memory_space<vmem>>) attributes {dimension_semantics = [#tpu.dimension_semantics<parallel>], iteration_bounds = array<i64: 1>, scalar_prefetch = 0 : i64, scratch_operands = 0 : i64, tpu.core_type = #tpu.core_type<tc>, window_params = [{transform_indices = @transform_0, window_bounds = array<i64: 8, 128>}, {pipeline_mode = #tpu.pipeline_mode<synchronous>, transform_indices = @transform_1, window_bounds = array<i64: 128, 128>}, {pipeline_mode = #tpu.pipeline_mode<synchronous>, transform_indices = @transform_2, window_bounds = array<i64: 1, 128>}, {transform_indices = @transform_3, window_bounds = array<i64: 8, 128>}]} {
    %c0 = arith.constant 0 : index
    %c0_0 = arith.constant 0 : index
    %0 = vector.load %arg1[%c0, %c0_0] : memref<8x128xbf16, #tpu.memory_space<vmem>>, vector<8x128xbf16>
    %c0_1 = arith.constant 0 : index
    %c0_2 = arith.constant 0 : index
    %1 = vector.load %arg2[%c0_1, %c0_2] : memref<128x128xbf16, #tpu.memory_space<vmem>>, vector<128x128xbf16>
    %cst = arith.constant dense<0.000000e+00> : vector<8x128xf32>
    %2 = tpu.matmul %0, %1, %cst {dimension_numbers = #tpu.dot_dimension_numbers<[1], [0], [0], [1], [0, 0, 1, 1], [], []>} : vector<8x128xbf16>, vector<128x128xbf16>, vector<8x128xf32> -> vector<8x128xf32>
    %c0_3 = arith.constant 0 : index
    %c0_4 = arith.constant 0 : index
    %3 = vector.load %arg3[%c0_3, %c0_4] : memref<1x128xf32, #tpu.memory_space<vmem>>, vector<1x128xf32>
    %4 = vector.broadcast %3 : vector<1x128xf32> to vector<8x128xf32>
    %5 = arith.addf %2, %4 : vector<8x128xf32>
    %6 = arith.negf %5 : vector<8x128xf32>
    %7 = math.exp %6 : vector<8x128xf32>
    %cst_5 = arith.constant 1.000000e+00 : f32
    %8 = vector.broadcast %cst_5 : f32 to vector<8x128xf32>
    %9 = arith.addf %8, %7 : vector<8x128xf32>
    %10 = arith.divf %8, %9 : vector<8x128xf32>
    %c0_6 = arith.constant 0 : index
    %c0_7 = arith.constant 0 : index
    %11 = vector.load %arg4[%c0_6, %c0_7] : memref<8x128xf32, #tpu.memory_space<vmem>>, vector<8x128xf32>
    tpu.vector_store %arg4[%c0_6, %c0_7], %10 {strides = array<i32>} : memref<8x128xf32, #tpu.memory_space<vmem>>, vector<8x128xf32>,
    return
  }
  func.func @transform_0(%arg0: i32) -> (i32, i32) {
    %c0_i32 = arith.constant 0 : i32
    %c0_i32_0 = arith.constant 0 : i32
    return %arg0, %c0_i32 : i32, i32
  }
  func.func @transform_1(%arg0: i32) -> (i32, i32) {
    %c0_i32 = arith.constant 0 : i32
    %c0_i32_0 = arith.constant 0 : i32
    %c0_i32_1 = arith.constant 0 : i32
    return %c0_i32, %c0_i32_0 : i32, i32
  }
  func.func @transform_2(%arg0: i32) -> (i32, i32) {
    %c0_i32 = arith.constant 0 : i32
    %c0_i32_0 = arith.constant 0 : i32
    %c0_i32_1 = arith.constant 0 : i32
    return %c0_i32, %c0_i32_0 : i32, i32
  }
  func.func @transform_3(%arg0: i32) -> (i32, i32) {
    %c0_i32 = arith.constant 0 : i32
    %c0_i32_0 = arith.constant 0 : i32
    return %arg0, %c0_i32 : i32, i32
  }
}

module attributes {stable_mosaic.version = 11 : i64} {
  func.func @film_layer_kernel(%arg0: i32, %arg1: i32, %arg2: memref<128x128xbf16, #tpu.memory_space<vmem>>, %arg3: memref<128x384xbf16, #tpu.memory_space<vmem>>, %arg4: memref<1x128xf32, #tpu.memory_space<vmem>>, %arg5: memref<1x128xf32, #tpu.memory_space<vmem>>, %arg6: memref<8x128xbf16, #tpu.memory_space<vmem>>, %arg7: memref<8x128xf32, #tpu.memory_space<vmem>>, %arg8: memref<8x128xf32, #tpu.memory_space<vmem>>) attributes {dimension_semantics = [#tpu.dimension_semantics<parallel>, #tpu.dimension_semantics<arbitrary>], iteration_bounds = array<i64: 1, 1>, scalar_prefetch = 0 : i64, scratch_operands = 1 : i64, tpu.core_type = #tpu.core_type<tc>, window_params = [{transform_indices = @transform_0, window_bounds = array<i64: 128, 128>}, {pipeline_mode = #tpu.pipeline_mode<synchronous>, transform_indices = @transform_1, window_bounds = array<i64: 128, 384>}, {pipeline_mode = #tpu.pipeline_mode<synchronous>, transform_indices = @transform_2, window_bounds = array<i64: 1, 128>}, {pipeline_mode = #tpu.pipeline_mode<synchronous>, transform_indices = @transform_3, window_bounds = array<i64: 1, 128>}, {transform_indices = @transform_4, window_bounds = array<i64: 8, 128>}, {transform_indices = @transform_5, window_bounds = array<i64: 8, 128>}]} {
    %c0_i32 = arith.constant 0 : i32
    %0 = arith.cmpi eq, %arg1, %c0_i32 : i32
    %1 = arith.extui %0 : i1 to i32
    %c0_i32_0 = arith.constant 0 : i32
    %2 = arith.cmpi ne, %1, %c0_i32_0 : i32
    scf.if %2 {
      %cst_14 = arith.constant 0.000000e+00 : f32
      %22 = vector.broadcast %cst_14 : f32 to vector<8x128xf32>
      %c0_15 = arith.constant 0 : index
      %c0_16 = arith.constant 0 : index
      %23 = vector.load %arg8[%c0_15, %c0_16] : memref<8x128xf32, #tpu.memory_space<vmem>>, vector<8x128xf32>
      tpu.vector_store %arg8[%c0_15, %c0_16], %22 {strides = array<i32>} : memref<8x128xf32, #tpu.memory_space<vmem>>, vector<8x128xf32>,
    } else {
    }
    %c0 = arith.constant 0 : index
    %c0_1 = arith.constant 0 : index
    %3 = vector.load %arg2[%c0, %c0_1] : memref<128x128xbf16, #tpu.memory_space<vmem>>, vector<128x128xbf16>
    %c0_2 = arith.constant 0 : index
    %c0_3 = arith.constant 0 : index
    %4 = vector.load %arg3[%c0_2, %c0_3] : memref<128x384xbf16, #tpu.memory_space<vmem>>, vector<128x384xbf16>
    %cst = arith.constant dense<0.000000e+00> : vector<128x384xf32>
    %5 = tpu.matmul %3, %4, %cst {dimension_numbers = #tpu.dot_dimension_numbers<[1], [0], [0], [1], [0, 0, 1, 1], [], []>} : vector<128x128xbf16>, vector<128x384xbf16>, vector<128x384xf32> -> vector<128x384xf32>
    %6 = vector.extract_strided_slice %5 {offsets = [0, 0], sizes = [128, 128], strides = [1, 1]} : vector<128x384xf32> to vector<128x128xf32>
    %7 = vector.extract_strided_slice %5 {offsets = [0, 128], sizes = [128, 128], strides = [1, 1]} : vector<128x384xf32> to vector<128x128xf32>
    %8 = vector.extract_strided_slice %5 {offsets = [0, 256], sizes = [128, 128], strides = [1, 1]} : vector<128x384xf32> to vector<128x128xf32>
    %9 = arith.mulf %7, %6 : vector<128x128xf32>
    %10 = arith.addf %9, %8 : vector<128x128xf32>
    %cst_4 = arith.constant 0.000000e+00 : f32
    %11 = vector.broadcast %cst_4 : f32 to vector<128x128xf32>
    %12 = arith.maximumf %10, %11 : vector<128x128xf32>
    %c0_5 = arith.constant 0 : index
    %c0_6 = arith.constant 0 : index
    %13 = vector.load %arg8[%c0_5, %c0_6] : memref<8x128xf32, #tpu.memory_space<vmem>>, vector<8x128xf32>
    %c0_7 = arith.constant 0 : index
    %c0_8 = arith.constant 0 : index
    %14 = vector.load %arg6[%c0_7, %c0_8] : memref<8x128xbf16, #tpu.memory_space<vmem>>, vector<8x128xbf16>
    %15 = arith.truncf %12 : vector<128x128xf32> to vector<128x128xbf16>
    %cst_9 = arith.constant dense<0.000000e+00> : vector<8x128xf32>
    %16 = tpu.matmul %14, %15, %cst_9 {dimension_numbers = #tpu.dot_dimension_numbers<[1], [0], [0], [1], [0, 0, 1, 1], [], []>} : vector<8x128xbf16>, vector<128x128xbf16>, vector<8x128xf32> -> vector<8x128xf32>
    %17 = arith.addf %13, %16 : vector<8x128xf32>
    %c0_10 = arith.constant 0 : index
    %c0_11 = arith.constant 0 : index
    %18 = vector.load %arg8[%c0_10, %c0_11] : memref<8x128xf32, #tpu.memory_space<vmem>>, vector<8x128xf32>
    tpu.vector_store %arg8[%c0_10, %c0_11], %17 {strides = array<i32>} : memref<8x128xf32, #tpu.memory_space<vmem>>, vector<8x128xf32>,
    %c0_i32_12 = arith.constant 0 : i32
    %19 = arith.cmpi eq, %arg1, %c0_i32_12 : i32
    %20 = arith.extui %19 : i1 to i32
    %c0_i32_13 = arith.constant 0 : i32
    %21 = arith.cmpi ne, %20, %c0_i32_13 : i32
    scf.if %21 {
      %c0_14 = arith.constant 0 : index
      %c0_15 = arith.constant 0 : index
      %22 = vector.load %arg8[%c0_14, %c0_15] : memref<8x128xf32, #tpu.memory_space<vmem>>, vector<8x128xf32>
      %cst_16 = arith.constant dense<0.000000e+00> : vector<8xf32>
      %23 = vector.multi_reduction <add>, %22, %cst_16 [1] : vector<8x128xf32> to vector<8xf32>
      %24 = vector.shape_cast %23 : vector<8xf32> to vector<8x1xf32>
      %cst_17 = arith.constant 6.250000e-02 : f32
      %25 = vector.broadcast %cst_17 : f32 to vector<8x1xf32>
      %26 = arith.mulf %24, %25 : vector<8x1xf32>
      %27 = arith.mulf %22, %22 : vector<8x128xf32>
      %cst_18 = arith.constant dense<0.000000e+00> : vector<8xf32>
      %28 = vector.multi_reduction <add>, %27, %cst_18 [1] : vector<8x128xf32> to vector<8xf32>
      %29 = vector.shape_cast %28 : vector<8xf32> to vector<8x1xf32>
      %cst_19 = arith.constant 6.250000e-02 : f32
      %30 = vector.broadcast %cst_19 : f32 to vector<8x1xf32>
      %31 = arith.mulf %29, %30 : vector<8x1xf32>
      %32 = arith.mulf %26, %26 : vector<8x1xf32>
      %33 = arith.subf %31, %32 : vector<8x1xf32>
      %34 = vector.broadcast %26 : vector<8x1xf32> to vector<8x128xf32>
      %35 = arith.subf %22, %34 : vector<8x128xf32>
      %cst_20 = arith.constant 9.99999974E-6 : f32
      %36 = vector.broadcast %cst_20 : f32 to vector<8x1xf32>
      %37 = arith.addf %33, %36 : vector<8x1xf32>
      %38 = math.rsqrt %37 : vector<8x1xf32>
      %39 = vector.broadcast %38 : vector<8x1xf32> to vector<8x128xf32>
      %40 = arith.mulf %35, %39 : vector<8x128xf32>
      %c0_21 = arith.constant 0 : index
      %c0_22 = arith.constant 0 : index
      %41 = vector.load %arg4[%c0_21, %c0_22] : memref<1x128xf32, #tpu.memory_space<vmem>>, vector<1x128xf32>
      %42 = vector.broadcast %41 : vector<1x128xf32> to vector<8x128xf32>
      %43 = arith.mulf %40, %42 : vector<8x128xf32>
      %c0_23 = arith.constant 0 : index
      %c0_24 = arith.constant 0 : index
      %44 = vector.load %arg5[%c0_23, %c0_24] : memref<1x128xf32, #tpu.memory_space<vmem>>, vector<1x128xf32>
      %45 = vector.broadcast %44 : vector<1x128xf32> to vector<8x128xf32>
      %46 = arith.addf %43, %45 : vector<8x128xf32>
      %c0_25 = arith.constant 0 : index
      %c0_26 = arith.constant 0 : index
      %47 = vector.load %arg7[%c0_25, %c0_26] : memref<8x128xf32, #tpu.memory_space<vmem>>, vector<8x128xf32>
      tpu.vector_store %arg7[%c0_25, %c0_26], %46 {strides = array<i32>} : memref<8x128xf32, #tpu.memory_space<vmem>>, vector<8x128xf32>,
    } else {
    }
    return
  }
  func.func @transform_0(%arg0: i32, %arg1: i32) -> (i32, i32) {
    %c0_i32 = arith.constant 0 : i32
    %c0_i32_0 = arith.constant 0 : i32
    return %arg1, %c0_i32 : i32, i32
  }
  func.func @transform_1(%arg0: i32, %arg1: i32) -> (i32, i32) {
    %c0_i32 = arith.constant 0 : i32
    %c0_i32_0 = arith.constant 0 : i32
    %c0_i32_1 = arith.constant 0 : i32
    return %c0_i32, %c0_i32_0 : i32, i32
  }
  func.func @transform_2(%arg0: i32, %arg1: i32) -> (i32, i32) {
    %c0_i32 = arith.constant 0 : i32
    %c0_i32_0 = arith.constant 0 : i32
    %c0_i32_1 = arith.constant 0 : i32
    return %c0_i32, %c0_i32_0 : i32, i32
  }
  func.func @transform_3(%arg0: i32, %arg1: i32) -> (i32, i32) {
    %c0_i32 = arith.constant 0 : i32
    %c0_i32_0 = arith.constant 0 : i32
    %c0_i32_1 = arith.constant 0 : i32
    return %c0_i32, %c0_i32_0 : i32, i32
  }
  func.func @transform_4(%arg0: i32, %arg1: i32) -> (i32, i32) {
    %c0_i32 = arith.constant 0 : i32
    return %arg0, %arg1 : i32, i32
  }
  func.func @transform_5(%arg0: i32, %arg1: i32) -> (i32, i32) {
    %c0_i32 = arith.constant 0 : i32
    %c0_i32_0 = arith.constant 0 : i32
    return %arg0, %c0_i32 : i32, i32
  }
}

</mosaic_0001>

<llo_original>
// kernel: _forward_compute.5
$region0: #{_forward_compute.5}
  #allocation0 [shape = 'u32[]', space=smem, size = 0x4, offset = 0x4, fixed_abs, tag = 'smem constant byte address 0x4 - core index']
  #allocation1 [shape = 'u32[144,128]{1,0:T(1,128)}', space=vmem, size = 0x12000, scoped, tag = 'internal scratch']
  %s0 = inlined_call_operand.vmem [shape: bf16[8,128], index: 0, kind: input, shape index: {}]
  %s1 = inlined_call_operand.vmem [shape: bf16[128,128], index: 1, kind: input, shape index: {}]
  %s2 = inlined_call_operand.vmem [shape: f32[1,128], index: 2, kind: input, shape index: {}]
  %s3 = inlined_call_operand.vmem [shape: f32[8,128], index: 3, kind: output, shape index: {}]
  %s4 = sld [smem:[#allocation0]]
  $region22: #{_forward_compute.5} parent=0
    _
  %s6 = ssub.s32 1, %s4
  %s7 = scalar_select 0, %s6, %s4
  // Predicated region
  $region2: #{_forward_compute.5} parent=0 // pred_check
    _
  $region3: #{_forward_compute.5} parent=0 // pred_check_branch
    %9 = sbr.rel (0) target = $region5
  $region4: #{_forward_compute.5} parent=0 // pred_region
    _
  $region5: #{_forward_compute.5} parent=0 // pred_fallthru
    _
  // Predicated region
  $region6: #{_forward_compute.5} parent=0 // pred_check
    _
  $region7: #{_forward_compute.5} parent=0 // pred_check_branch
    %11 = sbr.rel (0) target = $region9
  $region8: #{_forward_compute.5} parent=0 // pred_region
    _
  $region9: #{_forward_compute.5} parent=0 // pred_fallthru
    _
  // Predicated region
  $region10: #{_forward_compute.5} parent=0 // pred_check
    _
  $region11: #{_forward_compute.5} parent=0 // pred_check_branch
    %13 = sbr.rel (0) target = $region13
  $region12: #{_forward_compute.5} parent=0 // pred_region
    _
  $region13: #{_forward_compute.5} parent=0 // pred_fallthru
    _
  %v15 = vld [vmem:[%s0] sm:$0xf]
  %v16 = vld [vmem:[%s1] sm:$0xf]
  %v17 = vld [vmem:[%s1 + $0x4] sm:$0xf]
  %v18 = vld [vmem:[%s1 + $0x8] sm:$0xf]
  %v19 = vld [vmem:[%s1 + $0xc] sm:$0xf]
  %v20 = vld [vmem:[%s1 + $0x10] sm:$0xf]
  %v21 = vld [vmem:[%s1 + $0x14] sm:$0xf]
  %v22 = vld [vmem:[%s1 + $0x18] sm:$0xf]
  %v23 = vld [vmem:[%s1 + $0x1c] sm:$0xf]
  %v24 = vld [vmem:[%s1 + $0x20] sm:$0xf]
  %v25 = vld [vmem:[%s1 + $0x24] sm:$0xf]
  %v26 = vld [vmem:[%s1 + $0x28] sm:$0xf]
  %v27 = vld [vmem:[%s1 + $0x2c] sm:$0xf]
  %v28 = vld [vmem:[%s1 + $0x30] sm:$0xf]
  %v29 = vld [vmem:[%s1 + $0x34] sm:$0xf]
  %v30 = vld [vmem:[%s1 + $0x38] sm:$0xf]
  %v31 = vld [vmem:[%s1 + $0x3c] sm:$0xf]
  %v32 = vld [vmem:[%s2] sm:$0x1]
  %v34 = vlaneseq
  %v35 = vshrl.u32 %v34, 7
  %v36 = vsub.s32 0, %v35
  %v37 = vrot.slane %v32, %v36
  %v55 = vunpack.c.l.b16 %v16
  %v56 = vunpack.c.l.b16 %v17
  %v57 = vunpack.c.l.b16 %v18
  %v58 = vunpack.c.l.b16 %v19
  %v59 = vunpack.c.l.b16 %v20
  %v60 = vunpack.c.l.b16 %v21
  %v61 = vunpack.c.l.b16 %v22
  %v62 = vunpack.c.l.b16 %v23
  %v63 = vunpack.c.l.b16 %v24
  %v64 = vunpack.c.l.b16 %v25
  %v65 = vunpack.c.l.b16 %v26
  %v66 = vunpack.c.l.b16 %v27
  %v67 = vunpack.c.l.b16 %v28
  %v68 = vunpack.c.l.b16 %v29
  %v69 = vunpack.c.l.b16 %v30
  %v70 = vunpack.c.l.b16 %v31
  %v71 = vpack.c.b16 %v56, %v55
  %v72 = vpack.c.b16 %v58, %v57
  %v73 = vpack.c.b16 %v60, %v59
  %v74 = vpack.c.b16 %v62, %v61
  %v75 = vpack.c.b16 %v64, %v63
  %v76 = vpack.c.b16 %v66, %v65
  %v77 = vpack.c.b16 %v68, %v67
  %v78 = vpack.c.b16 %v70, %v69
  %87 = vmatprep.subr.bf16.mxu0 0
  %88 = vmatpush1.bf16.msra.mxu0 %v71
  %89 = vmatprep.subr.bf16.mxu0 0
  %90 = vmatpush1.bf16.msra.mxu0 %v72
  %91 = vmatprep.subr.bf16.mxu0 0
  %92 = vmatpush1.bf16.msra.mxu0 %v73
  %93 = vmatprep.subr.bf16.mxu0 0
  %94 = vmatpush1.bf16.msra.mxu0 %v74
  %95 = vmatprep.subr.bf16.mxu0 0
  %96 = vmatpush1.bf16.msra.mxu0 %v75
  %97 = vmatprep.subr.bf16.mxu0 0
  %98 = vmatpush1.bf16.msra.mxu0 %v76
  %99 = vmatprep.subr.bf16.mxu0 0
  %100 = vmatpush1.bf16.msra.mxu0 %v77
  %101 = vmatprep.subr.bf16.mxu0 0
  %102 = vmatpush1.bf16.msra.mxu0 %v78
  %103 = vmatprep.subr.bf16.mxu0 0
  %104 = vmatpush1.bf16.msra.mxu0 0
  %105 = vmatprep.subr.bf16.mxu0 0
  %106 = vmatpush1.bf16.msra.mxu0 0
  %107 = vmatprep.subr.bf16.mxu0 0
  %108 = vmatpush1.bf16.msra.mxu0 0
  %109 = vmatprep.subr.bf16.mxu0 0
  %110 = vmatpush1.bf16.msra.mxu0 0
  %111 = vmatprep.subr.bf16.mxu0 0
  %112 = vmatpush1.bf16.msra.mxu0 0
  %113 = vmatprep.subr.bf16.mxu0 0
  %114 = vmatpush1.bf16.msra.mxu0 0
  %115 = vmatprep.subr.bf16.mxu0 0
  %116 = vmatpush1.bf16.msra.mxu0 0
  %117 = vmatprep.subr.bf16.mxu0 0
  %118 = vmatpush1.bf16.msra.mxu0 0
  %119 = vmatprep.mubr.bf16.mxu0 0
  %120 = vmatmul.mubr.bf16.gmra.mrb[0].mxu0 %v15
  %v121 = vpop.f32.mrb[0].mxu0
  %v122 = vadd.f32 %v37, %v121
  %v123 = vpop.f32.mrb[0].mxu0
  %v124 = vpop.f32.mrb[0].mxu0
  %v125 = vpop.f32.mrb[0].mxu0
  %126 = vdwg.mxu0
  %v127 = vxor.u32 %v122, 2147483648
  %v128 = vmul.f32 %v127, 1.442695
  %v129 = vpow.pop %v128
  %v130 = vadd.f32 %v129, 1.0
  %v131 = vrcp.pop %v130
  %v132 = vmul.f32 1.0, %v131
  %133 = vst [vmem:[%s3] sm:$0xff] %v132
  // Predicated region
  $region14: #{_forward_compute.5} parent=0 // pred_check
    _
  $region15: #{_forward_compute.5} parent=0 // pred_check_branch
    %135 = sbr.rel (0) target = $region17
  $region16: #{_forward_compute.5} parent=0 // pred_region
    _
  $region17: #{_forward_compute.5} parent=0 // pred_fallthru
    _
  // Predicated region
  $region18: #{_forward_compute.5} parent=0 // pred_check
    _
  $region19: #{_forward_compute.5} parent=0 // pred_check_branch
    %137 = sbr.rel (0) target = $region21
  $region20: #{_forward_compute.5} parent=0 // pred_region
    _
  $region21: #{_forward_compute.5} parent=0 // pred_fallthru
    _

// kernel: _forward_compute.3
$region0: #{_forward_compute.3}
  #allocation0 [shape = 'u32[]', space=smem, size = 0x4, offset = 0x4, fixed_abs, tag = 'smem constant byte address 0x4 - core index']
  #allocation1 [shape = 'u32[144,128]{1,0:T(1,128)}', space=vmem, size = 0x12000, scoped, tag = 'internal scratch']
  #allocation2 [shape = 'f32[8,128]{1,0:T(8,128)}', space=vmem, size = 0x1000, scoped, tag = 'scratch operand']
  %s0 = inlined_call_operand.vmem [shape: bf16[128,128], index: 0, kind: input, shape index: {}]
  %s1 = inlined_call_operand.hbm [shape: bf16[128,384], index: 1, kind: input, shape index: {}]
  %s2 = inlined_call_operand.vmem [shape: f32[1,128], index: 2, kind: input, shape index: {}]
  %s3 = inlined_call_operand.vmem [shape: f32[1,128], index: 3, kind: input, shape index: {}]
  %s4 = inlined_call_operand.vmem [shape: bf16[8,128], index: 4, kind: input, shape index: {}]
  %s5 = inlined_call_operand.vmem [shape: f32[8,128], index: 5, kind: output, shape index: {}]
  %s6 = sld [smem:[#allocation0]]
  $region42: #{_forward_compute.3} parent=0
    _
  %s8 = ssub.s32 1, %s6
  %s9 = scalar_select 0, %s8, %s6
  $region1: #{_forward_compute.3} parent=0
    #allocation3 [shape = 'u8[98304]{0}', space=vmem, size = 0x18000, scoped, tag = 'input window, operand 1, single buffered']
    #allocation4 [shape = 's32[1]{0}', space=sflag, size = 0x4, scoped, tag = 'scoped memory for _forward_compute.3']
    %10 = vsyncpa [#allocation4], 0
    // Predicated region
    $region2: #{_forward_compute.3} parent=1 // pred_check
      _
    $region3: #{_forward_compute.3} parent=1 // pred_check_branch
      %12 = sbr.rel (0) target = $region5
    $region4: #{_forward_compute.3} parent=1 // pred_region
      _
    $region5: #{_forward_compute.3} parent=1 // pred_fallthru
      _
    // Predicated region
    $region6: #{_forward_compute.3} parent=1 // pred_check
      _
    $region7: #{_forward_compute.3} parent=1 // pred_check_branch
      %14 = sbr.rel (0) target = $region9
    $region8: #{_forward_compute.3} parent=1 // pred_region
      %s16 = ssub.s32 3072, 3072
      %17 = vsyncadd [#allocation4], %s16
      %s18 = sshll.u32 [#allocation3], 4
      %s19 = int_to_ptr.vmem [resolvable:$true] %s18
      %24 = dma.hbm_to_vmem [thread:$0]  %s1, 3072, %s19, [#allocation4], 192, 192, 12
    $region9: #{_forward_compute.3} parent=1 // pred_fallthru
      _
    // Predicated region
    $region10: #{_forward_compute.3} parent=1 // pred_check
      _
    $region11: #{_forward_compute.3} parent=1 // pred_check_branch
      %26 = sbr.rel (0) target = $region13
    $region12: #{_forward_compute.3} parent=1 // pred_region
      _
    $region13: #{_forward_compute.3} parent=1 // pred_fallthru
      _
    // Predicated region
    $region14: #{_forward_compute.3} parent=1 // pred_check
      _
    $region15: #{_forward_compute.3} parent=1 // pred_check_branch
      %28 = sbr.rel (0) target = $region17
    $region16: #{_forward_compute.3} parent=1 // pred_region
      _
    $region17: #{_forward_compute.3} parent=1 // pred_fallthru
      _
    // Predicated region
    $region18: #{_forward_compute.3} parent=1 // pred_check
      _
    $region19: #{_forward_compute.3} parent=1 // pred_check_branch
      %30 = sbr.rel (0) target = $region21
    $region20: #{_forward_compute.3} parent=1 // pred_region
      _
    $region21: #{_forward_compute.3} parent=1 // pred_fallthru
      _
    // Predicated region
    $region22: #{_forward_compute.3} parent=1 // pred_check
      _
    $region23: #{_forward_compute.3} parent=1 // pred_check_branch
      %32 = sbr.rel (0) target = $region25
    $region24: #{_forward_compute.3} parent=1 // pred_region
      %33 = dma.done [#allocation4], 3072
    $region25: #{_forward_compute.3} parent=1 // pred_fallthru
      _
    %p35 = scmp.eq.s32.totalorder 0, 0
    // Predicated region
    $region26: #{_forward_compute.3} parent=1 // pred_check
      %p36 = pneg %p35
    $region27: #{_forward_compute.3} parent=1 // pred_check_branch
      %38 = sbr.rel (%p36) target = $region29
    $region28: #{_forward_compute.3} parent=1 // pred_region
      %39 = vst [vmem:[#allocation2] sm:$0xff] 0.0
    $region29: #{_forward_compute.3} parent=1 // pred_fallthru
      _
    %v40 = vld [vmem:[%s0] sm:$0xf]
    %v41 = vld [vmem:[%s0 + $0x4] sm:$0xf]
    %v42 = vld [vmem:[%s0 + $0x8] sm:$0xf]
    %v43 = vld [vmem:[%s0 + $0xc] sm:$0xf]
    %v44 = vld [vmem:[%s0 + $0x10] sm:$0xf]
    %v45 = vld [vmem:[%s0 + $0x14] sm:$0xf]
    %v46 = vld [vmem:[%s0 + $0x18] sm:$0xf]
    %v47 = vld [vmem:[%s0 + $0x1c] sm:$0xf]
    %v48 = vld [vmem:[%s0 + $0x20] sm:$0xf]
    %v49 = vld [vmem:[%s0 + $0x24] sm:$0xf]
    %v50 = vld [vmem:[%s0 + $0x28] sm:$0xf]
    %v51 = vld [vmem:[%s0 + $0x2c] sm:$0xf]
    %v52 = vld [vmem:[%s0 + $0x30] sm:$0xf]
    %v53 = vld [vmem:[%s0 + $0x34] sm:$0xf]
    %v54 = vld [vmem:[%s0 + $0x38] sm:$0xf]
    %v55 = vld [vmem:[%s0 + $0x3c] sm:$0xf]
    %v56 = vld [vmem:[#allocation3] sm:$0xff]
    %v57 = vld [vmem:[#allocation3 + $0x8] sm:$0xf]
    %v58 = vld [vmem:[#allocation3 + $0xc] sm:$0xff]
    %v59 = vld [vmem:[#allocation3 + $0x14] sm:$0xf]
    %v60 = vld [vmem:[#allocation3 + $0x18] sm:$0xff]
    %v61 = vld [vmem:[#allocation3 + $0x20] sm:$0xf]
    %v62 = vld [vmem:[#allocation3 + $0x24] sm:$0xff]
    %v63 = vld [vmem:[#allocation3 + $0x2c] sm:$0xf]
    %v64 = vld [vmem:[#allocation3 + $0x30] sm:$0xff]
    %v65 = vld [vmem:[#allocation3 + $0x38] sm:$0xf]
    %v66 = vld [vmem:[#allocation3 + $0x3c] sm:$0xff]
    %v67 = vld [vmem:[#allocation3 + $0x44] sm:$0xf]
    %v68 = vld [vmem:[#allocation3 + $0x48] sm:$0xff]
    %v69 = vld [vmem:[#allocation3 + $0x50] sm:$0xf]
    %v70 = vld [vmem:[#allocation3 + $0x54] sm:$0xff]
    %v71 = vld [vmem:[#allocation3 + $0x5c] sm:$0xf]
    %v72 = vld [vmem:[#allocation3 + $0x60] sm:$0xff]
    %v73 = vld [vmem:[#allocation3 + $0x68] sm:$0xf]
    %v74 = vld [vmem:[#allocation3 + $0x6c] sm:$0xff]
    %v75 = vld [vmem:[#allocation3 + $0x74] sm:$0xf]
    %v76 = vld [vmem:[#allocation3 + $0x78] sm:$0xff]
    %v77 = vld [vmem:[#allocation3 + $0x80] sm:$0xf]
    %v78 = vld [vmem:[#allocation3 + $0x84] sm:$0xff]
    %v79 = vld [vmem:[#allocation3 + $0x8c] sm:$0xf]
    %v80 = vld [vmem:[#allocation3 + $0x90] sm:$0xff]
    %v81 = vld [vmem:[#allocation3 + $0x98] sm:$0xf]
    %v82 = vld [vmem:[#allocation3 + $0x9c] sm:$0xff]
    %v83 = vld [vmem:[#allocation3 + $0xa4] sm:$0xf]
    %v84 = vld [vmem:[#allocation3 + $0xa8] sm:$0xff]
    %v85 = vld [vmem:[#allocation3 + $0xb0] sm:$0xf]
    %v86 = vld [vmem:[#allocation3 + $0xb4] sm:$0xff]
    %v87 = vld [vmem:[#allocation3 + $0xbc] sm:$0xf]
    %v104 = vunpack.c.l.b16 %v40
    %v105 = vunpack.c.l.b16 %v41
    %v106 = vunpack.c.l.b16 %v42
    %v107 = vunpack.c.l.b16 %v43
    %v108 = vunpack.c.l.b16 %v44
    %v109 = vunpack.c.l.b16 %v45
    %v110 = vunpack.c.l.b16 %v46
    %v111 = vunpack.c.l.b16 %v47
    %v112 = vunpack.c.l.b16 %v48
    %v113 = vunpack.c.l.b16 %v49
    %v114 = vunpack.c.l.b16 %v50
    %v115 = vunpack.c.l.b16 %v51
    %v116 = vunpack.c.l.b16 %v52
    %v117 = vunpack.c.l.b16 %v53
    %v118 = vunpack.c.l.b16 %v54
    %v119 = vunpack.c.l.b16 %v55
    %v120 = vpack.c.b16 %v105, %v104
    %v121 = vpack.c.b16 %v107, %v106
    %v122 = vpack.c.b16 %v109, %v108
    %v123 = vpack.c.b16 %v111, %v110
    %v124 = vpack.c.b16 %v113, %v112
    %v125 = vpack.c.b16 %v115, %v114
    %v126 = vpack.c.b16 %v117, %v116
    %v127 = vpack.c.b16 %v119, %v118
    %v168 = vunpack.c.l.b16 %v56
    %v169 = vunpack.c.h.b16 %v56
    %v170 = vunpack.c.l.b16 %v57
    %v171 = vunpack.c.l.b16 %v58
    %v172 = vunpack.c.h.b16 %v58
    %v173 = vunpack.c.l.b16 %v59
    %v174 = vunpack.c.l.b16 %v60
    %v175 = vunpack.c.h.b16 %v60
    %v176 = vunpack.c.l.b16 %v61
    %v177 = vunpack.c.l.b16 %v62
    %v178 = vunpack.c.h.b16 %v62
    %v179 = vunpack.c.l.b16 %v63
    %v180 = vunpack.c.l.b16 %v64
    %v181 = vunpack.c.h.b16 %v64
    %v182 = vunpack.c.l.b16 %v65
    %v183 = vunpack.c.l.b16 %v66
    %v184 = vunpack.c.h.b16 %v66
    %v185 = vunpack.c.l.b16 %v67
    %v186 = vunpack.c.l.b16 %v68
    %v187 = vunpack.c.h.b16 %v68
    %v188 = vunpack.c.l.b16 %v69
    %v189 = vunpack.c.l.b16 %v70
    %v190 = vunpack.c.h.b16 %v70
    %v191 = vunpack.c.l.b16 %v71
    %v192 = vunpack.c.l.b16 %v72
    %v193 = vunpack.c.h.b16 %v72
    %v194 = vunpack.c.l.b16 %v73
    %v195 = vunpack.c.l.b16 %v74
    %v196 = vunpack.c.h.b16 %v74
    %v197 = vunpack.c.l.b16 %v75
    %v198 = vunpack.c.l.b16 %v76
    %v199 = vunpack.c.h.b16 %v76
    %v200 = vunpack.c.l.b16 %v77
    %v201 = vunpack.c.l.b16 %v78
    %v202 = vunpack.c.h.b16 %v78
    %v203 = vunpack.c.l.b16 %v79
    %v204 = vunpack.c.l.b16 %v80
    %v205 = vunpack.c.h.b16 %v80
    %v206 = vunpack.c.l.b16 %v81
    %v207 = vunpack.c.l.b16 %v82
    %v208 = vunpack.c.h.b16 %v82
    %v209 = vunpack.c.l.b16 %v83
    %v210 = vunpack.c.l.b16 %v84
    %v211 = vunpack.c.h.b16 %v84
    %v212 = vunpack.c.l.b16 %v85
    %v213 = vunpack.c.l.b16 %v86
    %v214 = vunpack.c.h.b16 %v86
    %v215 = vunpack.c.l.b16 %v87
    %v216 = vpack.c.b16 %v171, %v168
    %v217 = vpack.c.b16 %v172, %v169
    %v218 = vpack.c.b16 %v173, %v170
    %v219 = vpack.c.b16 %v177, %v174
    %v220 = vpack.c.b16 %v178, %v175
    %v221 = vpack.c.b16 %v179, %v176
    %v222 = vpack.c.b16 %v183, %v180
    %v223 = vpack.c.b16 %v184, %v181
    %v224 = vpack.c.b16 %v185, %v182
    %v225 = vpack.c.b16 %v189, %v186
    %v226 = vpack.c.b16 %v190, %v187
    %v227 = vpack.c.b16 %v191, %v188
    %v228 = vpack.c.b16 %v195, %v192
    %v229 = vpack.c.b16 %v196, %v193
    %v230 = vpack.c.b16 %v197, %v194
    %v231 = vpack.c.b16 %v201, %v198
    %v232 = vpack.c.b16 %v202, %v199
    %v233 = vpack.c.b16 %v203, %v200
    %v234 = vpack.c.b16 %v207, %v204
    %v235 = vpack.c.b16 %v208, %v205
    %v236 = vpack.c.b16 %v209, %v206
    %v237 = vpack.c.b16 %v213, %v210
    %v238 = vpack.c.b16 %v214, %v211
    %v239 = vpack.c.b16 %v215, %v212
    %264 = vmatprep.subr.bf16.mxu0 %v217
    %265 = vmatpush1.bf16.msra.mxu0 %v216
    %266 = vmatprep.subr.bf16.mxu0 %v220
    %267 = vmatpush1.bf16.msra.mxu0 %v219
    %268 = vmatprep.subr.bf16.mxu0 %v223
    %269 = vmatpush1.bf16.msra.mxu0 %v222
    %270 = vmatprep.subr.bf16.mxu0 %v226
    %271 = vmatpush1.bf16.msra.mxu0 %v225
    %272 = vmatprep.subr.bf16.mxu0 %v229
    %273 = vmatpush1.bf16.msra.mxu0 %v228
    %274 = vmatprep.subr.bf16.mxu0 %v232
    %275 = vmatpush1.bf16.msra.mxu0 %v231
    %276 = vmatprep.subr.bf16.mxu0 %v235
    %277 = vmatpush1.bf16.msra.mxu0 %v234
    %278 = vmatprep.subr.bf16.mxu0 %v238
    %279 = vmatpush1.bf16.msra.mxu0 %v237
    %280 = vmatprep.subr.bf16.mxu0 0
    %281 = vmatpush1.bf16.msra.mxu0 0
    %282 = vmatprep.subr.bf16.mxu0 0
    %283 = vmatpush1.bf16.msra.mxu0 0
    %284 = vmatprep.subr.bf16.mxu0 0
    %285 = vmatpush1.bf16.msra.mxu0 0
    %286 = vmatprep.subr.bf16.mxu0 0
    %287 = vmatpush1.bf16.msra.mxu0 0
    %288 = vmatprep.subr.bf16.mxu0 0
    %289 = vmatpush1.bf16.msra.mxu0 0
    %290 = vmatprep.subr.bf16.mxu0 0
    %291 = vmatpush1.bf16.msra.mxu0 0
    %292 = vmatprep.subr.bf16.mxu0 0
    %293 = vmatpush1.bf16.msra.mxu0 0
    %294 = vmatprep.subr.bf16.mxu0 0
    %295 = vmatpush1.bf16.msra.mxu0 0
    %296 = vmatprep.mubr.bf16.mxu0 0
    %297 = vmatmul.mubr.bf16.gmra.mrb[0].mxu0 %v120
    %v298 = vpop.f32.mrb[0].mxu0
    %v299 = vadd.f32 0.0, %v298
    %v300 = vpop.f32.mrb[0].mxu0
    %v301 = vadd.f32 0.0, %v300
    %v302 = vpop.f32.mrb[0].mxu0
    %v303 = vadd.f32 0.0, %v302
    %v304 = vpop.f32.mrb[0].mxu0
    %v305 = vadd.f32 0.0, %v304
    %306 = vmatprep.mubr.bf16.mxu0 0
    %307 = vmatmul.mubr.bf16.gmra.mrb[0].mxu0 %v121
    %v308 = vpop.f32.mrb[0].mxu0
    %v309 = vadd.f32 0.0, %v308
    %v310 = vpop.f32.mrb[0].mxu0
    %v311 = vadd.f32 0.0, %v310
    %v312 = vpop.f32.mrb[0].mxu0
    %v313 = vadd.f32 0.0, %v312
    %v314 = vpop.f32.mrb[0].mxu0
    %v315 = vadd.f32 0.0, %v314
    %316 = vmatprep.mubr.bf16.mxu0 0
    %317 = vmatmul.mubr.bf16.gmra.mrb[0].mxu0 %v122
    %v318 = vpop.f32.mrb[0].mxu0
    %v319 = vadd.f32 0.0, %v318
    %v320 = vpop.f32.mrb[0].mxu0
    %v321 = vadd.f32 0.0, %v320
    %v322 = vpop.f32.mrb[0].mxu0
    %v323 = vadd.f32 0.0, %v322
    %v324 = vpop.f32.mrb[0].mxu0
    %v325 = vadd.f32 0.0, %v324
    %326 = vmatprep.mubr.bf16.mxu0 0
    %327 = vmatmul.mubr.bf16.gmra.mrb[0].mxu0 %v123
    %v328 = vpop.f32.mrb[0].mxu0
    %v329 = vadd.f32 0.0, %v328
    %v330 = vpop.f32.mrb[0].mxu0
    %v331 = vadd.f32 0.0, %v330
    %v332 = vpop.f32.mrb[0].mxu0
    %v333 = vadd.f32 0.0, %v332
    %v334 = vpop.f32.mrb[0].mxu0
    %v335 = vadd.f32 0.0, %v334
    %336 = vmatprep.mubr.bf16.mxu0 0
    %337 = vmatmul.mubr.bf16.gmra.mrb[0].mxu0 %v124
    %v338 = vpop.f32.mrb[0].mxu0
    %v339 = vadd.f32 0.0, %v338
    %v340 = vpop.f32.mrb[0].mxu0
    %v341 = vadd.f32 0.0, %v340
    %v342 = vpop.f32.mrb[0].mxu0
    %v343 = vadd.f32 0.0, %v342
    %v344 = vpop.f32.mrb[0].mxu0
    %v345 = vadd.f32 0.0, %v344
    %346 = vmatprep.mubr.bf16.mxu0 0
    %347 = vmatmul.mubr.bf16.gmra.mrb[0].mxu0 %v125
    %v348 = vpop.f32.mrb[0].mxu0
    %v349 = vadd.f32 0.0, %v348
    %v350 = vpop.f32.mrb[0].mxu0
    %v351 = vadd.f32 0.0, %v350
    %v352 = vpop.f32.mrb[0].mxu0
    %v353 = vadd.f32 0.0, %v352
    %v354 = vpop.f32.mrb[0].mxu0
    %v355 = vadd.f32 0.0, %v354
    %356 = vmatprep.mubr.bf16.mxu0 0
    %357 = vmatmul.mubr.bf16.gmra.mrb[0].mxu0 %v126
    %v358 = vpop.f32.mrb[0].mxu0
    %v359 = vadd.f32 0.0, %v358
    %v360 = vpop.f32.mrb[0].mxu0
    %v361 = vadd.f32 0.0, %v360
    %v362 = vpop.f32.mrb[0].mxu0
    %v363 = vadd.f32 0.0, %v362
    %v364 = vpop.f32.mrb[0].mxu0
    %v365 = vadd.f32 0.0, %v364
    %366 = vmatprep.mubr.bf16.mxu0 0
    %367 = vmatmul.mubr.bf16.gmra.mrb[0].mxu0 %v127
    %v368 = vpop.f32.mrb[0].mxu0
    %v369 = vadd.f32 0.0, %v368
    %v370 = vpop.f32.mrb[0].mxu0
    %v371 = vadd.f32 0.0, %v370
    %v372 = vpop.f32.mrb[0].mxu0
    %v373 = vadd.f32 0.0, %v372
    %v374 = vpop.f32.mrb[0].mxu0
    %v375 = vadd.f32 0.0, %v374
    %376 = vdwg.mxu0
    %377 = vmatprep.subr.bf16.mxu0 0
    %378 = vmatpush1.bf16.msra.mxu0 %v218
    %379 = vmatprep.subr.bf16.mxu0 0
    %380 = vmatpush1.bf16.msra.mxu0 %v221
    %381 = vmatprep.subr.bf16.mxu0 0
    %382 = vmatpush1.bf16.msra.mxu0 %v224
    %383 = vmatprep.subr.bf16.mxu0 0
    %384 = vmatpush1.bf16.msra.mxu0 %v227
    %385 = vmatprep.subr.bf16.mxu0 0
    %386 = vmatpush1.bf16.msra.mxu0 %v230
    %387 = vmatprep.subr.bf16.mxu0 0
    %388 = vmatpush1.bf16.msra.mxu0 %v233
    %389 = vmatprep.subr.bf16.mxu0 0
    %390 = vmatpush1.bf16.msra.mxu0 %v236
    %391 = vmatprep.subr.bf16.mxu0 0
    %392 = vmatpush1.bf16.msra.mxu0 %v239
    %393 = vmatprep.subr.bf16.mxu0 0
    %394 = vmatpush1.bf16.msra.mxu0 0
    %395 = vmatprep.subr.bf16.mxu0 0
    %396 = vmatpush1.bf16.msra.mxu0 0
    %397 = vmatprep.subr.bf16.mxu0 0
    %398 = vmatpush1.bf16.msra.mxu0 0
    %399 = vmatprep.subr.bf16.mxu0 0
    %400 = vmatpush1.bf16.msra.mxu0 0
    %401 = vmatprep.subr.bf16.mxu0 0
    %402 = vmatpush1.bf16.msra.mxu0 0
    %403 = vmatprep.subr.bf16.mxu0 0
    %404 = vmatpush1.bf16.msra.mxu0 0
    %405 = vmatprep.subr.bf16.mxu0 0
    %406 = vmatpush1.bf16.msra.mxu0 0
    %407 = vmatprep.subr.bf16.mxu0 0
    %408 = vmatpush1.bf16.msra.mxu0 0
    %409 = vmatprep.mubr.bf16.mxu0 0
    %410 = vmatmul.mubr.bf16.gmra.mrb[0].mxu0 %v120
    %v411 = vpop.f32.mrb[0].mxu0
    %v412 = vadd.f32 0.0, %v411
    %v413 = vpop.f32.mrb[0].mxu0
    %v414 = vpop.f32.mrb[0].mxu0
    %v415 = vadd.f32 0.0, %v414
    %v416 = vpop.f32.mrb[0].mxu0
    %417 = vmatprep.mubr.bf16.mxu0 0
    %418 = vmatmul.mubr.bf16.gmra.mrb[0].mxu0 %v121
    %v419 = vpop.f32.mrb[0].mxu0
    %v420 = vadd.f32 0.0, %v419
    %v421 = vpop.f32.mrb[0].mxu0
    %v422 = vpop.f32.mrb[0].mxu0
    %v423 = vadd.f32 0.0, %v422
    %v424 = vpop.f32.mrb[0].mxu0
    %425 = vmatprep.mubr.bf16.mxu0 0
    %426 = vmatmul.mubr.bf16.gmra.mrb[0].mxu0 %v122
    %v427 = vpop.f32.mrb[0].mxu0
    %v428 = vadd.f32 0.0, %v427
    %v429 = vpop.f32.mrb[0].mxu0
    %v430 = vpop.f32.mrb[0].mxu0
    %v431 = vadd.f32 0.0, %v430
    %v432 = vpop.f32.mrb[0].mxu0
    %433 = vmatprep.mubr.bf16.mxu0 0
    %434 = vmatmul.mubr.bf16.gmra.mrb[0].mxu0 %v123
    %v435 = vpop.f32.mrb[0].mxu0
    %v436 = vadd.f32 0.0, %v435
    %v437 = vpop.f32.mrb[0].mxu0
    %v438 = vpop.f32.mrb[0].mxu0
    %v439 = vadd.f32 0.0, %v438
    %v440 = vpop.f32.mrb[0].mxu0
    %441 = vmatprep.mubr.bf16.mxu0 0
    %442 = vmatmul.mubr.bf16.gmra.mrb[0].mxu0 %v124
    %v443 = vpop.f32.mrb[0].mxu0
    %v444 = vadd.f32 0.0, %v443
    %v445 = vpop.f32.mrb[0].mxu0
    %v446 = vpop.f32.mrb[0].mxu0
    %v447 = vadd.f32 0.0, %v446
    %v448 = vpop.f32.mrb[0].mxu0
    %449 = vmatprep.mubr.bf16.mxu0 0
    %450 = vmatmul.mubr.bf16.gmra.mrb[0].mxu0 %v125
    %v451 = vpop.f32.mrb[0].mxu0
    %v452 = vadd.f32 0.0, %v451
    %v453 = vpop.f32.mrb[0].mxu0
    %v454 = vpop.f32.mrb[0].mxu0
    %v455 = vadd.f32 0.0, %v454
    %v456 = vpop.f32.mrb[0].mxu0
    %457 = vmatprep.mubr.bf16.mxu0 0
    %458 = vmatmul.mubr.bf16.gmra.mrb[0].mxu0 %v126
    %v459 = vpop.f32.mrb[0].mxu0
    %v460 = vadd.f32 0.0, %v459
    %v461 = vpop.f32.mrb[0].mxu0
    %v462 = vpop.f32.mrb[0].mxu0
    %v463 = vadd.f32 0.0, %v462
    %v464 = vpop.f32.mrb[0].mxu0
    %465 = vmatprep.mubr.bf16.mxu0 0
    %466 = vmatmul.mubr.bf16.gmra.mrb[0].mxu0 %v127
    %v467 = vpop.f32.mrb[0].mxu0
    %v468 = vadd.f32 0.0, %v467
    %v469 = vpop.f32.mrb[0].mxu0
    %v470 = vpop.f32.mrb[0].mxu0
    %v471 = vadd.f32 0.0, %v470
    %v472 = vpop.f32.mrb[0].mxu0
    %473 = vdwg.mxu0
    %v474 = vmul.f32 %v301, %v299
    %v475 = vmul.f32 %v305, %v303
    %v476 = vmul.f32 %v311, %v309
    %v477 = vmul.f32 %v315, %v313
    %v478 = vmul.f32 %v321, %v319
    %v479 = vmul.f32 %v325, %v323
    %v480 = vmul.f32 %v331, %v329
    %v481 = vmul.f32 %v335, %v333
    %v482 = vmul.f32 %v341, %v339
    %v483 = vmul.f32 %v345, %v343
    %v484 = vmul.f32 %v351, %v349
    %v485 = vmul.f32 %v355, %v353
    %v486 = vmul.f32 %v361, %v359
    %v487 = vmul.f32 %v365, %v363
    %v488 = vmul.f32 %v371, %v369
    %v489 = vmul.f32 %v375, %v373
    %v490 = vadd.f32 %v474, %v412
    %v491 = vadd.f32 %v475, %v415
    %v492 = vadd.f32 %v476, %v420
    %v493 = vadd.f32 %v477, %v423
    %v494 = vadd.f32 %v478, %v428
    %v495 = vadd.f32 %v479, %v431
    %v496 = vadd.f32 %v480, %v436
    %v497 = vadd.f32 %v481, %v439
    %v498 = vadd.f32 %v482, %v444
    %v499 = vadd.f32 %v483, %v447
    %v500 = vadd.f32 %v484, %v452
    %v501 = vadd.f32 %v485, %v455
    %v502 = vadd.f32 %v486, %v460
    %v503 = vadd.f32 %v487, %v463
    %v504 = vadd.f32 %v488, %v468
    %v505 = vadd.f32 %v489, %v471
    %v506 = vmax.f32 %v490, 0.0
    %v507 = vmax.f32 %v491, 0.0
    %v508 = vmax.f32 %v492, 0.0
    %v509 = vmax.f32 %v493, 0.0
    %v510 = vmax.f32 %v494, 0.0
    %v511 = vmax.f32 %v495, 0.0
    %v512 = vmax.f32 %v496, 0.0
    %v513 = vmax.f32 %v497, 0.0
    %v514 = vmax.f32 %v498, 0.0
    %v515 = vmax.f32 %v499, 0.0
    %v516 = vmax.f32 %v500, 0.0
    %v517 = vmax.f32 %v501, 0.0
    %v518 = vmax.f32 %v502, 0.0
    %v519 = vmax.f32 %v503, 0.0
    %v520 = vmax.f32 %v504, 0.0
    %v521 = vmax.f32 %v505, 0.0
    %v522 = vld [vmem:[#allocation2] sm:$0xff]
    %v523 = vld [vmem:[%s4] sm:$0xf]
    %v524 = vpack.c.bf16 %v507, %v506
    %v525 = vpack.c.bf16 %v509, %v508
    %v526 = vpack.c.bf16 %v511, %v510
    %v527 = vpack.c.bf16 %v513, %v512
    %v528 = vpack.c.bf16 %v515, %v514
    %v529 = vpack.c.bf16 %v517, %v516
    %v530 = vpack.c.bf16 %v519, %v518
    %v531 = vpack.c.bf16 %v521, %v520
    %532 = vmatprep.subr.bf16.mxu0 0
    %533 = vmatpush1.bf16.msra.mxu0 %v524
    %534 = vmatprep.subr.bf16.mxu0 0
    %535 = vmatpush1.bf16.msra.mxu0 %v525
    %536 = vmatprep.subr.bf16.mxu0 0
    %537 = vmatpush1.bf16.msra.mxu0 %v526
    %538 = vmatprep.subr.bf16.mxu0 0
    %539 = vmatpush1.bf16.msra.mxu0 %v527
    %540 = vmatprep.subr.bf16.mxu0 0
    %541 = vmatpush1.bf16.msra.mxu0 %v528
    %542 = vmatprep.subr.bf16.mxu0 0
    %543 = vmatpush1.bf16.msra.mxu0 %v529
    %544 = vmatprep.subr.bf16.mxu0 0
    %545 = vmatpush1.bf16.msra.mxu0 %v530
    %546 = vmatprep.subr.bf16.mxu0 0
    %547 = vmatpush1.bf16.msra.mxu0 %v531
    %548 = vmatprep.subr.bf16.mxu0 0
    %549 = vmatpush1.bf16.msra.mxu0 0
    %550 = vmatprep.subr.bf16.mxu0 0
    %551 = vmatpush1.bf16.msra.mxu0 0
    %552 = vmatprep.subr.bf16.mxu0 0
    %553 = vmatpush1.bf16.msra.mxu0 0
    %554 = vmatprep.subr.bf16.mxu0 0
    %555 = vmatpush1.bf16.msra.mxu0 0
    %556 = vmatprep.subr.bf16.mxu0 0
    %557 = vmatpush1.bf16.msra.mxu0 0
    %558 = vmatprep.subr.bf16.mxu0 0
    %559 = vmatpush1.bf16.msra.mxu0 0
    %560 = vmatprep.subr.bf16.mxu0 0
    %561 = vmatpush1.bf16.msra.mxu0 0
    %562 = vmatprep.subr.bf16.mxu0 0
    %563 = vmatpush1.bf16.msra.mxu0 0
    %564 = vmatprep.mubr.bf16.mxu0 0
    %565 = vmatmul.mubr.bf16.gmra.mrb[0].mxu0 %v523
    %v566 = vpop.f32.mrb[0].mxu0
    %v567 = vadd.f32 0.0, %v566
    %v568 = vpop.f32.mrb[0].mxu0
    %v569 = vpop.f32.mrb[0].mxu0
    %v570 = vpop.f32.mrb[0].mxu0
    %571 = vdwg.mxu0
    %v572 = vadd.f32 %v522, %v567
    %573 = vst [vmem:[#allocation2] sm:$0xff] %v572
    // Predicated region
    $region30: #{_forward_compute.3} parent=1 // pred_check
      %p574 = pneg %p35
    $region31: #{_forward_compute.3} parent=1 // pred_check_branch
      %576 = sbr.rel (%p574) target = $region33
    $region32: #{_forward_compute.3} parent=1 // pred_region
      %v577 = vld [vmem:[#allocation2] sm:$0xff]
      %578 = vadd.xlane.f32.xlu0 %v577
      %v579 = vpop.xlane.xlu0 %578
      %v580 = vmul.f32 %v579, 0.0625
      %v581 = vmul.f32 %v577, %v577
      %582 = vadd.xlane.f32.xlu0 %v581
      %v583 = vpop.xlane.xlu0 %582
      %v584 = vmul.f32 %v583, 0.0625
      %v585 = vmul.f32 %v580, %v580
      %v586 = vsub.f32 %v584, %v585
      %v587 = vsub.f32 %v577, %v580
      %v588 = vadd.f32 %v586, 1e-05
      %v589 = vrsqrt.pop %v588
      %v590 = vmul.f32 %v587, %v589
      %v591 = vld [vmem:[%s2] sm:$0x1]
      %v593 = vlaneseq
      %v594 = vshrl.u32 %v593, 7
      %v595 = vsub.s32 0, %v594
      %v596 = vrot.slane %v591, %v595
      %v598 = vmul.f32 %v590, %v596
      %v599 = vld [vmem:[%s3] sm:$0x1]
      %v601 = vlaneseq
      %v602 = vshrl.u32 %v601, 7
      %v603 = vsub.s32 0, %v602
      %v604 = vrot.slane %v599, %v603
      %v606 = vadd.f32 %v598, %v604
      %607 = vst [vmem:[%s5] sm:$0xff] %v606
    $region33: #{_forward_compute.3} parent=1 // pred_fallthru
      _
    // Predicated region
    $region34: #{_forward_compute.3} parent=1 // pred_check
      _
    $region35: #{_forward_compute.3} parent=1 // pred_check_branch
      %609 = sbr.rel (0) target = $region37
    $region36: #{_forward_compute.3} parent=1 // pred_region
      _
    $region37: #{_forward_compute.3} parent=1 // pred_fallthru
      _
    // Predicated region
    $region38: #{_forward_compute.3} parent=1 // pred_check
      _
    $region39: #{_forward_compute.3} parent=1 // pred_check_branch
      %611 = sbr.rel (0) target = $region41
    $region40: #{_forward_compute.3} parent=1 // pred_region
      _
    $region41: #{_forward_compute.3} parent=1 // pred_fallthru
      _
    %612 = vsyncpa [#allocation4], 1

// kernel: _forward_compute.4
$region0: #{_forward_compute.4}
  #allocation0 [shape = 'u32[]', space=smem, size = 0x4, offset = 0x4, fixed_abs, tag = 'smem constant byte address 0x4 - core index']
  #allocation1 [shape = 'u32[144,128]{1,0:T(1,128)}', space=vmem, size = 0x12000, scoped, tag = 'internal scratch']
  #allocation2 [shape = 'f32[8,128]{1,0:T(8,128)}', space=vmem, size = 0x1000, scoped, tag = 'scratch operand']
  %s0 = inlined_call_operand.vmem [shape: bf16[128,128], index: 0, kind: input, shape index: {}]
  %s1 = inlined_call_operand.vmem [shape: bf16[128,384], index: 1, kind: input, shape index: {}]
  %s2 = inlined_call_operand.vmem [shape: f32[1,128], index: 2, kind: input, shape index: {}]
  %s3 = inlined_call_operand.vmem [shape: f32[1,128], index: 3, kind: input, shape index: {}]
  %s4 = inlined_call_operand.vmem [shape: bf16[8,128], index: 4, kind: input, shape index: {}]
  %s5 = inlined_call_operand.vmem [shape: f32[8,128], index: 5, kind: output, shape index: {}]
  %s6 = sld [smem:[#allocation0]]
  $region38: #{_forward_compute.4} parent=0
    _
  %s8 = ssub.s32 1, %s6
  %s9 = scalar_select 0, %s8, %s6
  // Predicated region
  $region2: #{_forward_compute.4} parent=0 // pred_check
    _
  $region3: #{_forward_compute.4} parent=0 // pred_check_branch
    %11 = sbr.rel (0) target = $region5
  $region4: #{_forward_compute.4} parent=0 // pred_region
    _
  $region5: #{_forward_compute.4} parent=0 // pred_fallthru
    _
  // Predicated region
  $region6: #{_forward_compute.4} parent=0 // pred_check
    _
  $region7: #{_forward_compute.4} parent=0 // pred_check_branch
    %13 = sbr.rel (0) target = $region9
  $region8: #{_forward_compute.4} parent=0 // pred_region
    _
  $region9: #{_forward_compute.4} parent=0 // pred_fallthru
    _
  // Predicated region
  $region10: #{_forward_compute.4} parent=0 // pred_check
    _
  $region11: #{_forward_compute.4} parent=0 // pred_check_branch
    %15 = sbr.rel (0) target = $region13
  $region12: #{_forward_compute.4} parent=0 // pred_region
    _
  $region13: #{_forward_compute.4} parent=0 // pred_fallthru
    _
  // Predicated region
  $region14: #{_forward_compute.4} parent=0 // pred_check
    _
  $region15: #{_forward_compute.4} parent=0 // pred_check_branch
    %17 = sbr.rel (0) target = $region17
  $region16: #{_forward_compute.4} parent=0 // pred_region
    _
  $region17: #{_forward_compute.4} parent=0 // pred_fallthru
    _
  // Predicated region
  $region18: #{_forward_compute.4} parent=0 // pred_check
    _
  $region19: #{_forward_compute.4} parent=0 // pred_check_branch
    %19 = sbr.rel (0) target = $region21
  $region20: #{_forward_compute.4} parent=0 // pred_region
    _
  $region21: #{_forward_compute.4} parent=0 // pred_fallthru
    _
  %p21 = scmp.eq.s32.totalorder 0, 0
  // Predicated region
  $region22: #{_forward_compute.4} parent=0 // pred_check
    %p22 = pneg %p21
  $region23: #{_forward_compute.4} parent=0 // pred_check_branch
    %24 = sbr.rel (%p22) target = $region25
  $region24: #{_forward_compute.4} parent=0 // pred_region
    %25 = vst [vmem:[#allocation2] sm:$0xff] 0.0
  $region25: #{_forward_compute.4} parent=0 // pred_fallthru
    _
  %v26 = vld [vmem:[%s0] sm:$0xf]
  %v27 = vld [vmem:[%s0 + $0x4] sm:$0xf]
  %v28 = vld [vmem:[%s0 + $0x8] sm:$0xf]
  %v29 = vld [vmem:[%s0 + $0xc] sm:$0xf]
  %v30 = vld [vmem:[%s0 + $0x10] sm:$0xf]
  %v31 = vld [vmem:[%s0 + $0x14] sm:$0xf]
  %v32 = vld [vmem:[%s0 + $0x18] sm:$0xf]
  %v33 = vld [vmem:[%s0 + $0x1c] sm:$0xf]
  %v34 = vld [vmem:[%s0 + $0x20] sm:$0xf]
  %v35 = vld [vmem:[%s0 + $0x24] sm:$0xf]
  %v36 = vld [vmem:[%s0 + $0x28] sm:$0xf]
  %v37 = vld [vmem:[%s0 + $0x2c] sm:$0xf]
  %v38 = vld [vmem:[%s0 + $0x30] sm:$0xf]
  %v39 = vld [vmem:[%s0 + $0x34] sm:$0xf]
  %v40 = vld [vmem:[%s0 + $0x38] sm:$0xf]
  %v41 = vld [vmem:[%s0 + $0x3c] sm:$0xf]
  %v42 = vld [vmem:[%s1] sm:$0xff]
  %v43 = vld [vmem:[%s1 + $0x8] sm:$0xf]
  %v44 = vld [vmem:[%s1 + $0xc] sm:$0xff]
  %v45 = vld [vmem:[%s1 + $0x14] sm:$0xf]
  %v46 = vld [vmem:[%s1 + $0x18] sm:$0xff]
  %v47 = vld [vmem:[%s1 + $0x20] sm:$0xf]
  %v48 = vld [vmem:[%s1 + $0x24] sm:$0xff]
  %v49 = vld [vmem:[%s1 + $0x2c] sm:$0xf]
  %v50 = vld [vmem:[%s1 + $0x30] sm:$0xff]
  %v51 = vld [vmem:[%s1 + $0x38] sm:$0xf]
  %v52 = vld [vmem:[%s1 + $0x3c] sm:$0xff]
  %v53 = vld [vmem:[%s1 + $0x44] sm:$0xf]
  %v54 = vld [vmem:[%s1 + $0x48] sm:$0xff]
  %v55 = vld [vmem:[%s1 + $0x50] sm:$0xf]
  %v56 = vld [vmem:[%s1 + $0x54] sm:$0xff]
  %v57 = vld [vmem:[%s1 + $0x5c] sm:$0xf]
  %v58 = vld [vmem:[%s1 + $0x60] sm:$0xff]
  %v59 = vld [vmem:[%s1 + $0x68] sm:$0xf]
  %v60 = vld [vmem:[%s1 + $0x6c] sm:$0xff]
  %v61 = vld [vmem:[%s1 + $0x74] sm:$0xf]
  %v62 = vld [vmem:[%s1 + $0x78] sm:$0xff]
  %v63 = vld [vmem:[%s1 + $0x80] sm:$0xf]
  %v64 = vld [vmem:[%s1 + $0x84] sm:$0xff]
  %v65 = vld [vmem:[%s1 + $0x8c] sm:$0xf]
  %v66 = vld [vmem:[%s1 + $0x90] sm:$0xff]
  %v67 = vld [vmem:[%s1 + $0x98] sm:$0xf]
  %v68 = vld [vmem:[%s1 + $0x9c] sm:$0xff]
  %v69 = vld [vmem:[%s1 + $0xa4] sm:$0xf]
  %v70 = vld [vmem:[%s1 + $0xa8] sm:$0xff]
  %v71 = vld [vmem:[%s1 + $0xb0] sm:$0xf]
  %v72 = vld [vmem:[%s1 + $0xb4] sm:$0xff]
  %v73 = vld [vmem:[%s1 + $0xbc] sm:$0xf]
  %v90 = vunpack.c.l.b16 %v26
  %v91 = vunpack.c.l.b16 %v27
  %v92 = vunpack.c.l.b16 %v28
  %v93 = vunpack.c.l.b16 %v29
  %v94 = vunpack.c.l.b16 %v30
  %v95 = vunpack.c.l.b16 %v31
  %v96 = vunpack.c.l.b16 %v32
  %v97 = vunpack.c.l.b16 %v33
  %v98 = vunpack.c.l.b16 %v34
  %v99 = vunpack.c.l.b16 %v35
  %v100 = vunpack.c.l.b16 %v36
  %v101 = vunpack.c.l.b16 %v37
  %v102 = vunpack.c.l.b16 %v38
  %v103 = vunpack.c.l.b16 %v39
  %v104 = vunpack.c.l.b16 %v40
  %v105 = vunpack.c.l.b16 %v41
  %v106 = vpack.c.b16 %v91, %v90
  %v107 = vpack.c.b16 %v93, %v92
  %v108 = vpack.c.b16 %v95, %v94
  %v109 = vpack.c.b16 %v97, %v96
  %v110 = vpack.c.b16 %v99, %v98
  %v111 = vpack.c.b16 %v101, %v100
  %v112 = vpack.c.b16 %v103, %v102
  %v113 = vpack.c.b16 %v105, %v104
  %v154 = vunpack.c.l.b16 %v42
  %v155 = vunpack.c.h.b16 %v42
  %v156 = vunpack.c.l.b16 %v43
  %v157 = vunpack.c.l.b16 %v44
  %v158 = vunpack.c.h.b16 %v44
  %v159 = vunpack.c.l.b16 %v45
  %v160 = vunpack.c.l.b16 %v46
  %v161 = vunpack.c.h.b16 %v46
  %v162 = vunpack.c.l.b16 %v47
  %v163 = vunpack.c.l.b16 %v48
  %v164 = vunpack.c.h.b16 %v48
  %v165 = vunpack.c.l.b16 %v49
  %v166 = vunpack.c.l.b16 %v50
  %v167 = vunpack.c.h.b16 %v50
  %v168 = vunpack.c.l.b16 %v51
  %v169 = vunpack.c.l.b16 %v52
  %v170 = vunpack.c.h.b16 %v52
  %v171 = vunpack.c.l.b16 %v53
  %v172 = vunpack.c.l.b16 %v54
  %v173 = vunpack.c.h.b16 %v54
  %v174 = vunpack.c.l.b16 %v55
  %v175 = vunpack.c.l.b16 %v56
  %v176 = vunpack.c.h.b16 %v56
  %v177 = vunpack.c.l.b16 %v57
  %v178 = vunpack.c.l.b16 %v58
  %v179 = vunpack.c.h.b16 %v58
  %v180 = vunpack.c.l.b16 %v59
  %v181 = vunpack.c.l.b16 %v60
  %v182 = vunpack.c.h.b16 %v60
  %v183 = vunpack.c.l.b16 %v61
  %v184 = vunpack.c.l.b16 %v62
  %v185 = vunpack.c.h.b16 %v62
  %v186 = vunpack.c.l.b16 %v63
  %v187 = vunpack.c.l.b16 %v64
  %v188 = vunpack.c.h.b16 %v64
  %v189 = vunpack.c.l.b16 %v65
  %v190 = vunpack.c.l.b16 %v66
  %v191 = vunpack.c.h.b16 %v66
  %v192 = vunpack.c.l.b16 %v67
  %v193 = vunpack.c.l.b16 %v68
  %v194 = vunpack.c.h.b16 %v68
  %v195 = vunpack.c.l.b16 %v69
  %v196 = vunpack.c.l.b16 %v70
  %v197 = vunpack.c.h.b16 %v70
  %v198 = vunpack.c.l.b16 %v71
  %v199 = vunpack.c.l.b16 %v72
  %v200 = vunpack.c.h.b16 %v72
  %v201 = vunpack.c.l.b16 %v73
  %v202 = vpack.c.b16 %v157, %v154
  %v203 = vpack.c.b16 %v158, %v155
  %v204 = vpack.c.b16 %v159, %v156
  %v205 = vpack.c.b16 %v163, %v160
  %v206 = vpack.c.b16 %v164, %v161
  %v207 = vpack.c.b16 %v165, %v162
  %v208 = vpack.c.b16 %v169, %v166
  %v209 = vpack.c.b16 %v170, %v167
  %v210 = vpack.c.b16 %v171, %v168
  %v211 = vpack.c.b16 %v175, %v172
  %v212 = vpack.c.b16 %v176, %v173
  %v213 = vpack.c.b16 %v177, %v174
  %v214 = vpack.c.b16 %v181, %v178
  %v215 = vpack.c.b16 %v182, %v179
  %v216 = vpack.c.b16 %v183, %v180
  %v217 = vpack.c.b16 %v187, %v184
  %v218 = vpack.c.b16 %v188, %v185
  %v219 = vpack.c.b16 %v189, %v186
  %v220 = vpack.c.b16 %v193, %v190
  %v221 = vpack.c.b16 %v194, %v191
  %v222 = vpack.c.b16 %v195, %v192
  %v223 = vpack.c.b16 %v199, %v196
  %v224 = vpack.c.b16 %v200, %v197
  %v225 = vpack.c.b16 %v201, %v198
  %250 = vmatprep.subr.bf16.mxu0 %v203
  %251 = vmatpush1.bf16.msra.mxu0 %v202
  %252 = vmatprep.subr.bf16.mxu0 %v206
  %253 = vmatpush1.bf16.msra.mxu0 %v205
  %254 = vmatprep.subr.bf16.mxu0 %v209
  %255 = vmatpush1.bf16.msra.mxu0 %v208
  %256 = vmatprep.subr.bf16.mxu0 %v212
  %257 = vmatpush1.bf16.msra.mxu0 %v211
  %258 = vmatprep.subr.bf16.mxu0 %v215
  %259 = vmatpush1.bf16.msra.mxu0 %v214
  %260 = vmatprep.subr.bf16.mxu0 %v218
  %261 = vmatpush1.bf16.msra.mxu0 %v217
  %262 = vmatprep.subr.bf16.mxu0 %v221
  %263 = vmatpush1.bf16.msra.mxu0 %v220
  %264 = vmatprep.subr.bf16.mxu0 %v224
  %265 = vmatpush1.bf16.msra.mxu0 %v223
  %266 = vmatprep.subr.bf16.mxu0 0
  %267 = vmatpush1.bf16.msra.mxu0 0
  %268 = vmatprep.subr.bf16.mxu0 0
  %269 = vmatpush1.bf16.msra.mxu0 0
  %270 = vmatprep.subr.bf16.mxu0 0
  %271 = vmatpush1.bf16.msra.mxu0 0
  %272 = vmatprep.subr.bf16.mxu0 0
  %273 = vmatpush1.bf16.msra.mxu0 0
  %274 = vmatprep.subr.bf16.mxu0 0
  %275 = vmatpush1.bf16.msra.mxu0 0
  %276 = vmatprep.subr.bf16.mxu0 0
  %277 = vmatpush1.bf16.msra.mxu0 0
  %278 = vmatprep.subr.bf16.mxu0 0
  %279 = vmatpush1.bf16.msra.mxu0 0
  %280 = vmatprep.subr.bf16.mxu0 0
  %281 = vmatpush1.bf16.msra.mxu0 0
  %282 = vmatprep.mubr.bf16.mxu0 0
  %283 = vmatmul.mubr.bf16.gmra.mrb[0].mxu0 %v106
  %v284 = vpop.f32.mrb[0].mxu0
  %v285 = vadd.f32 0.0, %v284
  %v286 = vpop.f32.mrb[0].mxu0
  %v287 = vadd.f32 0.0, %v286
  %v288 = vpop.f32.mrb[0].mxu0
  %v289 = vadd.f32 0.0, %v288
  %v290 = vpop.f32.mrb[0].mxu0
  %v291 = vadd.f32 0.0, %v290
  %292 = vmatprep.mubr.bf16.mxu0 0
  %293 = vmatmul.mubr.bf16.gmra.mrb[0].mxu0 %v107
  %v294 = vpop.f32.mrb[0].mxu0
  %v295 = vadd.f32 0.0, %v294
  %v296 = vpop.f32.mrb[0].mxu0
  %v297 = vadd.f32 0.0, %v296
  %v298 = vpop.f32.mrb[0].mxu0
  %v299 = vadd.f32 0.0, %v298
  %v300 = vpop.f32.mrb[0].mxu0
  %v301 = vadd.f32 0.0, %v300
  %302 = vmatprep.mubr.bf16.mxu0 0
  %303 = vmatmul.mubr.bf16.gmra.mrb[0].mxu0 %v108
  %v304 = vpop.f32.mrb[0].mxu0
  %v305 = vadd.f32 0.0, %v304
  %v306 = vpop.f32.mrb[0].mxu0
  %v307 = vadd.f32 0.0, %v306
  %v308 = vpop.f32.mrb[0].mxu0
  %v309 = vadd.f32 0.0, %v308
  %v310 = vpop.f32.mrb[0].mxu0
  %v311 = vadd.f32 0.0, %v310
  %312 = vmatprep.mubr.bf16.mxu0 0
  %313 = vmatmul.mubr.bf16.gmra.mrb[0].mxu0 %v109
  %v314 = vpop.f32.mrb[0].mxu0
  %v315 = vadd.f32 0.0, %v314
  %v316 = vpop.f32.mrb[0].mxu0
  %v317 = vadd.f32 0.0, %v316
  %v318 = vpop.f32.mrb[0].mxu0
  %v319 = vadd.f32 0.0, %v318
  %v320 = vpop.f32.mrb[0].mxu0
  %v321 = vadd.f32 0.0, %v320
  %322 = vmatprep.mubr.bf16.mxu0 0
  %323 = vmatmul.mubr.bf16.gmra.mrb[0].mxu0 %v110
  %v324 = vpop.f32.mrb[0].mxu0
  %v325 = vadd.f32 0.0, %v324
  %v326 = vpop.f32.mrb[0].mxu0
  %v327 = vadd.f32 0.0, %v326
  %v328 = vpop.f32.mrb[0].mxu0
  %v329 = vadd.f32 0.0, %v328
  %v330 = vpop.f32.mrb[0].mxu0
  %v331 = vadd.f32 0.0, %v330
  %332 = vmatprep.mubr.bf16.mxu0 0
  %333 = vmatmul.mubr.bf16.gmra.mrb[0].mxu0 %v111
  %v334 = vpop.f32.mrb[0].mxu0
  %v335 = vadd.f32 0.0, %v334
  %v336 = vpop.f32.mrb[0].mxu0
  %v337 = vadd.f32 0.0, %v336
  %v338 = vpop.f32.mrb[0].mxu0
  %v339 = vadd.f32 0.0, %v338
  %v340 = vpop.f32.mrb[0].mxu0
  %v341 = vadd.f32 0.0, %v340
  %342 = vmatprep.mubr.bf16.mxu0 0
  %343 = vmatmul.mubr.bf16.gmra.mrb[0].mxu0 %v112
  %v344 = vpop.f32.mrb[0].mxu0
  %v345 = vadd.f32 0.0, %v344
  %v346 = vpop.f32.mrb[0].mxu0
  %v347 = vadd.f32 0.0, %v346
  %v348 = vpop.f32.mrb[0].mxu0
  %v349 = vadd.f32 0.0, %v348
  %v350 = vpop.f32.mrb[0].mxu0
  %v351 = vadd.f32 0.0, %v350
  %352 = vmatprep.mubr.bf16.mxu0 0
  %353 = vmatmul.mubr.bf16.gmra.mrb[0].mxu0 %v113
  %v354 = vpop.f32.mrb[0].mxu0
  %v355 = vadd.f32 0.0, %v354
  %v356 = vpop.f32.mrb[0].mxu0
  %v357 = vadd.f32 0.0, %v356
  %v358 = vpop.f32.mrb[0].mxu0
  %v359 = vadd.f32 0.0, %v358
  %v360 = vpop.f32.mrb[0].mxu0
  %v361 = vadd.f32 0.0, %v360
  %362 = vdwg.mxu0
  %363 = vmatprep.subr.bf16.mxu0 0
  %364 = vmatpush1.bf16.msra.mxu0 %v204
  %365 = vmatprep.subr.bf16.mxu0 0
  %366 = vmatpush1.bf16.msra.mxu0 %v207
  %367 = vmatprep.subr.bf16.mxu0 0
  %368 = vmatpush1.bf16.msra.mxu0 %v210
  %369 = vmatprep.subr.bf16.mxu0 0
  %370 = vmatpush1.bf16.msra.mxu0 %v213
  %371 = vmatprep.subr.bf16.mxu0 0
  %372 = vmatpush1.bf16.msra.mxu0 %v216
  %373 = vmatprep.subr.bf16.mxu0 0
  %374 = vmatpush1.bf16.msra.mxu0 %v219
  %375 = vmatprep.subr.bf16.mxu0 0
  %376 = vmatpush1.bf16.msra.mxu0 %v222
  %377 = vmatprep.subr.bf16.mxu0 0
  %378 = vmatpush1.bf16.msra.mxu0 %v225
  %379 = vmatprep.subr.bf16.mxu0 0
  %380 = vmatpush1.bf16.msra.mxu0 0
  %381 = vmatprep.subr.bf16.mxu0 0
  %382 = vmatpush1.bf16.msra.mxu0 0
  %383 = vmatprep.subr.bf16.mxu0 0
  %384 = vmatpush1.bf16.msra.mxu0 0
  %385 = vmatprep.subr.bf16.mxu0 0
  %386 = vmatpush1.bf16.msra.mxu0 0
  %387 = vmatprep.subr.bf16.mxu0 0
  %388 = vmatpush1.bf16.msra.mxu0 0
  %389 = vmatprep.subr.bf16.mxu0 0
  %390 = vmatpush1.bf16.msra.mxu0 0
  %391 = vmatprep.subr.bf16.mxu0 0
  %392 = vmatpush1.bf16.msra.mxu0 0
  %393 = vmatprep.subr.bf16.mxu0 0
  %394 = vmatpush1.bf16.msra.mxu0 0
  %395 = vmatprep.mubr.bf16.mxu0 0
  %396 = vmatmul.mubr.bf16.gmra.mrb[0].mxu0 %v106
  %v397 = vpop.f32.mrb[0].mxu0
  %v398 = vadd.f32 0.0, %v397
  %v399 = vpop.f32.mrb[0].mxu0
  %v400 = vpop.f32.mrb[0].mxu0
  %v401 = vadd.f32 0.0, %v400
  %v402 = vpop.f32.mrb[0].mxu0
  %403 = vmatprep.mubr.bf16.mxu0 0
  %404 = vmatmul.mubr.bf16.gmra.mrb[0].mxu0 %v107
  %v405 = vpop.f32.mrb[0].mxu0
  %v406 = vadd.f32 0.0, %v405
  %v407 = vpop.f32.mrb[0].mxu0
  %v408 = vpop.f32.mrb[0].mxu0
  %v409 = vadd.f32 0.0, %v408
  %v410 = vpop.f32.mrb[0].mxu0
  %411 = vmatprep.mubr.bf16.mxu0 0
  %412 = vmatmul.mubr.bf16.gmra.mrb[0].mxu0 %v108
  %v413 = vpop.f32.mrb[0].mxu0
  %v414 = vadd.f32 0.0, %v413
  %v415 = vpop.f32.mrb[0].mxu0
  %v416 = vpop.f32.mrb[0].mxu0
  %v417 = vadd.f32 0.0, %v416
  %v418 = vpop.f32.mrb[0].mxu0
  %419 = vmatprep.mubr.bf16.mxu0 0
  %420 = vmatmul.mubr.bf16.gmra.mrb[0].mxu0 %v109
  %v421 = vpop.f32.mrb[0].mxu0
  %v422 = vadd.f32 0.0, %v421
  %v423 = vpop.f32.mrb[0].mxu0
  %v424 = vpop.f32.mrb[0].mxu0
  %v425 = vadd.f32 0.0, %v424
  %v426 = vpop.f32.mrb[0].mxu0
  %427 = vmatprep.mubr.bf16.mxu0 0
  %428 = vmatmul.mubr.bf16.gmra.mrb[0].mxu0 %v110
  %v429 = vpop.f32.mrb[0].mxu0
  %v430 = vadd.f32 0.0, %v429
  %v431 = vpop.f32.mrb[0].mxu0
  %v432 = vpop.f32.mrb[0].mxu0
  %v433 = vadd.f32 0.0, %v432
  %v434 = vpop.f32.mrb[0].mxu0
  %435 = vmatprep.mubr.bf16.mxu0 0
  %436 = vmatmul.mubr.bf16.gmra.mrb[0].mxu0 %v111
  %v437 = vpop.f32.mrb[0].mxu0
  %v438 = vadd.f32 0.0, %v437
  %v439 = vpop.f32.mrb[0].mxu0
  %v440 = vpop.f32.mrb[0].mxu0
  %v441 = vadd.f32 0.0, %v440
  %v442 = vpop.f32.mrb[0].mxu0
  %443 = vmatprep.mubr.bf16.mxu0 0
  %444 = vmatmul.mubr.bf16.gmra.mrb[0].mxu0 %v112
  %v445 = vpop.f32.mrb[0].mxu0
  %v446 = vadd.f32 0.0, %v445
  %v447 = vpop.f32.mrb[0].mxu0
  %v448 = vpop.f32.mrb[0].mxu0
  %v449 = vadd.f32 0.0, %v448
  %v450 = vpop.f32.mrb[0].mxu0
  %451 = vmatprep.mubr.bf16.mxu0 0
  %452 = vmatmul.mubr.bf16.gmra.mrb[0].mxu0 %v113
  %v453 = vpop.f32.mrb[0].mxu0
  %v454 = vadd.f32 0.0, %v453
  %v455 = vpop.f32.mrb[0].mxu0
  %v456 = vpop.f32.mrb[0].mxu0
  %v457 = vadd.f32 0.0, %v456
  %v458 = vpop.f32.mrb[0].mxu0
  %459 = vdwg.mxu0
  %v460 = vmul.f32 %v287, %v285
  %v461 = vmul.f32 %v291, %v289
  %v462 = vmul.f32 %v297, %v295
  %v463 = vmul.f32 %v301, %v299
  %v464 = vmul.f32 %v307, %v305
  %v465 = vmul.f32 %v311, %v309
  %v466 = vmul.f32 %v317, %v315
  %v467 = vmul.f32 %v321, %v319
  %v468 = vmul.f32 %v327, %v325
  %v469 = vmul.f32 %v331, %v329
  %v470 = vmul.f32 %v337, %v335
  %v471 = vmul.f32 %v341, %v339
  %v472 = vmul.f32 %v347, %v345
  %v473 = vmul.f32 %v351, %v349
  %v474 = vmul.f32 %v357, %v355
  %v475 = vmul.f32 %v361, %v359
  %v476 = vadd.f32 %v460, %v398
  %v477 = vadd.f32 %v461, %v401
  %v478 = vadd.f32 %v462, %v406
  %v479 = vadd.f32 %v463, %v409
  %v480 = vadd.f32 %v464, %v414
  %v481 = vadd.f32 %v465, %v417
  %v482 = vadd.f32 %v466, %v422
  %v483 = vadd.f32 %v467, %v425
  %v484 = vadd.f32 %v468, %v430
  %v485 = vadd.f32 %v469, %v433
  %v486 = vadd.f32 %v470, %v438
  %v487 = vadd.f32 %v471, %v441
  %v488 = vadd.f32 %v472, %v446
  %v489 = vadd.f32 %v473, %v449
  %v490 = vadd.f32 %v474, %v454
  %v491 = vadd.f32 %v475, %v457
  %v492 = vmax.f32 %v476, 0.0
  %v493 = vmax.f32 %v477, 0.0
  %v494 = vmax.f32 %v478, 0.0
  %v495 = vmax.f32 %v479, 0.0
  %v496 = vmax.f32 %v480, 0.0
  %v497 = vmax.f32 %v481, 0.0
  %v498 = vmax.f32 %v482, 0.0
  %v499 = vmax.f32 %v483, 0.0
  %v500 = vmax.f32 %v484, 0.0
  %v501 = vmax.f32 %v485, 0.0
  %v502 = vmax.f32 %v486, 0.0
  %v503 = vmax.f32 %v487, 0.0
  %v504 = vmax.f32 %v488, 0.0
  %v505 = vmax.f32 %v489, 0.0
  %v506 = vmax.f32 %v490, 0.0
  %v507 = vmax.f32 %v491, 0.0
  %v508 = vld [vmem:[#allocation2] sm:$0xff]
  %v509 = vld [vmem:[%s4] sm:$0xf]
  %v510 = vpack.c.bf16 %v493, %v492
  %v511 = vpack.c.bf16 %v495, %v494
  %v512 = vpack.c.bf16 %v497, %v496
  %v513 = vpack.c.bf16 %v499, %v498
  %v514 = vpack.c.bf16 %v501, %v500
  %v515 = vpack.c.bf16 %v503, %v502
  %v516 = vpack.c.bf16 %v505, %v504
  %v517 = vpack.c.bf16 %v507, %v506
  %518 = vmatprep.subr.bf16.mxu0 0
  %519 = vmatpush1.bf16.msra.mxu0 %v510
  %520 = vmatprep.subr.bf16.mxu0 0
  %521 = vmatpush1.bf16.msra.mxu0 %v511
  %522 = vmatprep.subr.bf16.mxu0 0
  %523 = vmatpush1.bf16.msra.mxu0 %v512
  %524 = vmatprep.subr.bf16.mxu0 0
  %525 = vmatpush1.bf16.msra.mxu0 %v513
  %526 = vmatprep.subr.bf16.mxu0 0
  %527 = vmatpush1.bf16.msra.mxu0 %v514
  %528 = vmatprep.subr.bf16.mxu0 0
  %529 = vmatpush1.bf16.msra.mxu0 %v515
  %530 = vmatprep.subr.bf16.mxu0 0
  %531 = vmatpush1.bf16.msra.mxu0 %v516
  %532 = vmatprep.subr.bf16.mxu0 0
  %533 = vmatpush1.bf16.msra.mxu0 %v517
  %534 = vmatprep.subr.bf16.mxu0 0
  %535 = vmatpush1.bf16.msra.mxu0 0
  %536 = vmatprep.subr.bf16.mxu0 0
  %537 = vmatpush1.bf16.msra.mxu0 0
  %538 = vmatprep.subr.bf16.mxu0 0
  %539 = vmatpush1.bf16.msra.mxu0 0
  %540 = vmatprep.subr.bf16.mxu0 0
  %541 = vmatpush1.bf16.msra.mxu0 0
  %542 = vmatprep.subr.bf16.mxu0 0
  %543 = vmatpush1.bf16.msra.mxu0 0
  %544 = vmatprep.subr.bf16.mxu0 0
  %545 = vmatpush1.bf16.msra.mxu0 0
  %546 = vmatprep.subr.bf16.mxu0 0
  %547 = vmatpush1.bf16.msra.mxu0 0
  %548 = vmatprep.subr.bf16.mxu0 0
  %549 = vmatpush1.bf16.msra.mxu0 0
  %550 = vmatprep.mubr.bf16.mxu0 0
  %551 = vmatmul.mubr.bf16.gmra.mrb[0].mxu0 %v509
  %v552 = vpop.f32.mrb[0].mxu0
  %v553 = vadd.f32 0.0, %v552
  %v554 = vpop.f32.mrb[0].mxu0
  %v555 = vpop.f32.mrb[0].mxu0
  %v556 = vpop.f32.mrb[0].mxu0
  %557 = vdwg.mxu0
  %v558 = vadd.f32 %v508, %v553
  %559 = vst [vmem:[#allocation2] sm:$0xff] %v558
  // Predicated region
  $region26: #{_forward_compute.4} parent=0 // pred_check
    %p560 = pneg %p21
  $region27: #{_forward_compute.4} parent=0 // pred_check_branch
    %562 = sbr.rel (%p560) target = $region29
  $region28: #{_forward_compute.4} parent=0 // pred_region
    %v563 = vld [vmem:[#allocation2] sm:$0xff]
    %564 = vadd.xlane.f32.xlu0 %v563
    %v565 = vpop.xlane.xlu0 %564
    %v566 = vmul.f32 %v565, 0.0625
    %v567 = vmul.f32 %v563, %v563
    %568 = vadd.xlane.f32.xlu0 %v567
    %v569 = vpop.xlane.xlu0 %568
    %v570 = vmul.f32 %v569, 0.0625
    %v571 = vmul.f32 %v566, %v566
    %v572 = vsub.f32 %v570, %v571
    %v573 = vsub.f32 %v563, %v566
    %v574 = vadd.f32 %v572, 1e-05
    %v575 = vrsqrt.pop %v574
    %v576 = vmul.f32 %v573, %v575
    %v577 = vld [vmem:[%s2] sm:$0x1]
    %v579 = vlaneseq
    %v580 = vshrl.u32 %v579, 7
    %v581 = vsub.s32 0, %v580
    %v582 = vrot.slane %v577, %v581
    %v584 = vmul.f32 %v576, %v582
    %v585 = vld [vmem:[%s3] sm:$0x1]
    %v587 = vlaneseq
    %v588 = vshrl.u32 %v587, 7
    %v589 = vsub.s32 0, %v588
    %v590 = vrot.slane %v585, %v589
    %v592 = vadd.f32 %v584, %v590
    %593 = vst [vmem:[%s5] sm:$0xff] %v592
  $region29: #{_forward_compute.4} parent=0 // pred_fallthru
    _
  // Predicated region
  $region30: #{_forward_compute.4} parent=0 // pred_check
    _
  $region31: #{_forward_compute.4} parent=0 // pred_check_branch
    %595 = sbr.rel (0) target = $region33
  $region32: #{_forward_compute.4} parent=0 // pred_region
    _
  $region33: #{_forward_compute.4} parent=0 // pred_fallthru
    _
  // Predicated region
  $region34: #{_forward_compute.4} parent=0 // pred_check
    _
  $region35: #{_forward_compute.4} parent=0 // pred_check_branch
    %597 = sbr.rel (0) target = $region37
  $region36: #{_forward_compute.4} parent=0 // pred_region
    _
  $region37: #{_forward_compute.4} parent=0 // pred_fallthru
    _

</llo_original>
